<compile_context>
chip_gen: v7x
topology: tpu7x:2x2x1
jax: 0.10.0
libtpu: 0.0.40
codegen_flags: <defaults>
</compile_context>

<pallas_src>
import jax
import jax.numpy as jnp
import numpy as np
from jax.experimental import pallas as pl
from jax.experimental.pallas import tpu as pltpu

NUM_FEATS = 5      # [throughput, DOD, V_av, C_0, R_0]
NUM_HIDDEN = 10
H_PAD = 16         # hidden padded to two sublane tiles
STATIC_GROUPS = 2  # <= 16 fully-unrolled steps; beyond that use fori_loop over 8-step groups


def euler_mlp_kernel(h_ref, tp_ref, zs_ref, cr0_ref, w1in_ref, w2cr_ref, b2cr_ref,
                     out_ref, cr_scratch):
    """One time-chunk of the Euler recurrence for one 128-wide batch tile.

    h_ref   : [T, LB]       Euler step sizes (throughput diffs), time on sublanes
    tp_ref  : [T, LB]       throughput[:, i-1] for each step (feature-0 input)
    zs_ref  : [H_PAD, LB]   static hidden pre-activation: b1 + W1[:,1]*DOD + W1[:,2]*V_av
    cr0_ref : [8, LB]       rows 0,1 = C_0, R_0 (rest zero)
    w1in_ref: [H_PAD, 8]    cols 0,1,2 = W1 columns for throughput, C, R (zero padded)
    w2cr_ref: [8, H_PAD]    rows 0,1 = W2 output rows for C, R (zero padded)
    b2cr_ref: [8, 1]        rows 0,1 = b2[C], b2[R] (zero padded)
    out_ref : [2, T, LB]    out[0] = C trajectory, out[1] = R trajectory (row j == step j+1)
    cr_scratch: [8, LB]     recurrent state carried across time chunks
    """
    T, LB = h_ref.shape
    n_groups = T // 8

    # ---- loop-invariant broadcasts, hoisted (JAX does not CSE broadcasts per-iteration)
    zsb = zs_ref[...]                                                   # [H_PAD, LB]
    w_tp = jnp.broadcast_to(w1in_ref[:, 0:1], (H_PAD, LB))              # W1[:,0] (throughput)
    w_c = jnp.broadcast_to(w1in_ref[:, 1:2], (H_PAD, LB))               # W1[:,3] (C)
    w_r = jnp.broadcast_to(w1in_ref[:, 2:3], (H_PAD, LB))               # W1[:,4] (R)
    w2col = [jnp.broadcast_to(w2cr_ref[:, k:k + 1], (8, LB)) for k in range(NUM_HIDDEN)]
    b2b = jnp.broadcast_to(b2cr_ref[...], (8, LB))

    # first chunk for this batch tile: load the initial (C_0, R_0) state
    @pl.when(pl.program_id(1) == 0)
    def _():
        cr_scratch[...] = cr0_ref[...]

    def tree_sum(terms):
        # balanced reduction: depth ceil(log2(len)) instead of a serial left-fold
        while len(terms) > 1:
            nxt = [terms[i] + terms[i + 1] for i in range(0, len(terms) - 1, 2)]
            if len(terms) % 2:
                nxt.append(terms[-1])
            terms = nxt
        return terms[0]

    def group(g, cr):
        # one aligned (8, LB) load per group, static sublane extracts inside
        g8 = g * 8 if isinstance(g, int) else pl.multiple_of(g * 8, 8)
        h_tile = h_ref[pl.ds(g8, 8), :]                                 # [8, LB]
        tp_tile = tp_ref[pl.ds(g8, 8), :]                               # [8, LB]
        states = []
        for j in range(8):
            # layer 1: throughput/DOD/V_av contributions are off the recurrent chain;
            # only the C,R MACs depend on the previous state.
            z1 = (zsb + w_tp * tp_tile[j:j + 1, :]) + \
                 (w_c * cr[0:1, :] + w_r * cr[1:2, :])                  # [H_PAD, LB]
            a = jnp.tanh(z1)                                            # EUP
            # layer 2: only the C,R output rows are needed; tree-reduce 10 MACs + bias
            field = tree_sum([w2col[k] * a[k:k + 1, :] for k in range(NUM_HIDDEN)] + [b2b])
            # Euler step.  INVARIANT: `field` rows 2..7 are exactly zero because the
            # w2cr / b2cr pad rows are zero, so cr rows 2..7 stay zero.  Do not change
            # that padding without revisiting this update.
            cr = cr + h_tile[j:j + 1, :] * field
            states.append(cr)
        # flush 8 staged steps per feature as full (8, LB) tiles (lane/sublane dense)
        out_ref[0, pl.ds(g8, 8), :] = jnp.concatenate([s[0:1, :] for s in states], axis=0)
        out_ref[1, pl.ds(g8, 8), :] = jnp.concatenate([s[1:2, :] for s in states], axis=0)
        return cr

    cr = cr_scratch[...]
    if n_groups <= STATIC_GROUPS:
        for g in range(n_groups):
            cr = group(g, cr)
    else:
        cr = jax.lax.fori_loop(0, n_groups, group, cr)
    cr_scratch[...] = cr


def init_params(key):
    """Deterministic parameter init mirroring nn.Linear(5,10), nn.Linear(10,5) shapes."""
    k1, k2, k3, k4 = jax.random.split(key, 4)
    bound1 = 1.0 / np.sqrt(5.0)
    bound2 = 1.0 / np.sqrt(10.0)
    w1 = jax.random.uniform(k1, (10, 5), jnp.float32, -bound1, bound1).T   # [5, 10] (in,out)
    b1 = jax.random.uniform(k2, (10,), jnp.float32, -bound1, bound1)       # [10]
    w2 = jax.random.uniform(k3, (5, 10), jnp.float32, -bound2, bound2).T   # [10, 5] (in,out)
    b2 = jax.random.uniform(k4, (5,), jnp.float32, -bound2, bound2)        # [5]
    return w1, b1, w2, b2


def neural_network_forward(throughput, DOD, V_av, C_0, R_0, n, params, *, chunk_t=512):
    """Pallas-backed forward. Returns [B, n+1, 2] (evolved C_0, R_0 trajectory)."""
    assert n >= 1
    assert chunk_t % 8 == 0
    w1, b1, w2, b2 = params
    B = throughput.shape[0]

    # batch lanes: one block if B <= 128, else 128-wide blocks (parallel axis; on v7x
    # >=2 tiles are needed to occupy both TensorCores)
    LB = 128 if B > 128 else B
    B_pad = ((B + LB - 1) // LB) * LB
    num_b_tiles = B_pad // LB

    # time padding: steps padded to a multiple of 8, then to a multiple of the chunk size
    n8 = ((n + 7) // 8) * 8
    T = min(n8, chunk_t)
    n_pad = ((n8 + T - 1) // T) * T
    num_chunks = n_pad // T

    def pad_to(x, rows):
        return jnp.pad(x, ((0, rows - x.shape[0]), (0, B_pad - x.shape[1])))

    thr = throughput.astype(jnp.float32)
    h = pad_to((thr[:, 1:n + 1] - thr[:, :n]).T, n_pad)                  # [n_pad, B_pad]
    tp = pad_to(thr[:, :n].T, n_pad)                                     # [n_pad, B_pad]

    # static layer-1 term (per batch, time independent): b1 + W1[:,1]*DOD + W1[:,2]*V_av
    zs = b1[:, None] + jnp.outer(w1[1], DOD[0]) + jnp.outer(w1[2], V_av[0])   # [10, B]
    zs = pad_to(zs.astype(jnp.float32), H_PAD)                           # [H_PAD, B_pad]

    cr_init = jnp.stack([C_0[0], R_0[0]], axis=0).astype(jnp.float32)    # [2, B]
    cr0 = pad_to(cr_init, 8)                                             # [8, B_pad] rows 2..7 == 0

    # recurrent W1 columns (throughput, C, R) and the C/R rows of W2 / b2, zero padded.
    w1in = jnp.zeros((H_PAD, 8), jnp.float32)
    w1in = w1in.at[:NUM_HIDDEN, 0].set(w1[0])
    w1in = w1in.at[:NUM_HIDDEN, 1].set(w1[3])
    w1in = w1in.at[:NUM_HIDDEN, 2].set(w1[4])
    w2cr = jnp.zeros((8, H_PAD), jnp.float32)
    w2cr = w2cr.at[0, :NUM_HIDDEN].set(w2[:, 3])
    w2cr = w2cr.at[1, :NUM_HIDDEN].set(w2[:, 4])
    b2cr = jnp.zeros((8, 1), jnp.float32).at[0, 0].set(b2[3]).at[1, 0].set(b2[4])

    out = pl.pallas_call(
        euler_mlp_kernel,
        out_shape=jax.ShapeDtypeStruct((2, n_pad, B_pad), jnp.float32),
        grid=(num_b_tiles, num_chunks),
        in_specs=[
            pl.BlockSpec((T, LB), lambda b, c: (c, b)),                  # h
            pl.BlockSpec((T, LB), lambda b, c: (c, b)),                  # throughput[:, i-1]
            pl.BlockSpec((H_PAD, LB), lambda b, c: (0, b)),              # zs (static layer-1)
            pl.BlockSpec((8, LB), lambda b, c: (0, b)),                  # cr0
            pl.BlockSpec((H_PAD, 8), lambda b, c: (0, 0)),               # w1 recurrent cols
            pl.BlockSpec((8, H_PAD), lambda b, c: (0, 0)),               # w2 C/R rows
            pl.BlockSpec((8, 1), lambda b, c: (0, 0)),                   # b2 C/R
        ],
        out_specs=pl.BlockSpec((2, T, LB), lambda b, c: (0, c, b)),
        scratch_shapes=[pltpu.VMEM((8, LB), jnp.float32)],               # carried (C,R) state
        compiler_params=pltpu.CompilerParams(
            dimension_semantics=("parallel", "arbitrary"),
            vmem_limit_bytes=32 * 1024 * 1024),
    )(h, tp, zs, cr0, w1in, w2cr, b2cr)

    # out[f, j, b] = feature f (0=C, 1=R) after step j+1; prepend step 0 and reorder.
    traj = jnp.concatenate([cr_init[:, None, :], out[:, :n, :B]], axis=1)   # [2, n+1, B]
    return jnp.transpose(traj, (2, 1, 0))                                   # [B, n+1, 2]


def reference_forward(throughput, DOD, V_av, C_0, R_0, n, params):
    """Pure-JAX reference mirroring the PyTorch loop."""
    w1, b1, w2, b2 = params

    def f(x):
        return jnp.tanh(x @ w1 + b1) @ w2 + b2

    y0 = jnp.concatenate([throughput[:, 0:1], DOD.T, V_av.T, C_0.T, R_0.T], axis=1)
    init = y0
    state = y0
    ys = [y0]
    for i in range(1, n + 1):
        h = (throughput[:, i] - throughput[:, i - 1])[:, None]
        new = state + h * f(state)
        new = new.at[:, 0].set(throughput[:, i])
        new = new.at[:, 1:3].set(init[:, 1:3])
        ys.append(new)
        state = new
    y = jnp.stack(ys, axis=1)
    return y[:, :, -2:]


if __name__ == "__main__":
    key = jax.random.PRNGKey(0)
    k_tp, k_dod, k_v, k_c, k_r, k_params = jax.random.split(key, 6)

    B = 8       # batch
    n = 20      # Euler steps (throughput has n+1 samples); exercises padding + fori path

    throughput = jnp.cumsum(
        jax.random.uniform(k_tp, (B, n + 1), jnp.float32, 0.1, 1.0), axis=1
    )
    DOD = jnp.round(jax.random.uniform(k_dod, (1, B), jnp.float32, 0.1, 1.0), 2)
    V_av = jnp.round(jax.random.uniform(k_v, (1, B), jnp.float32, 3.0, 4.2), 2)
    C_0 = jax.random.uniform(k_c, (1, B), jnp.float32, 0.9, 1.1)
    R_0 = jax.random.uniform(k_r, (1, B), jnp.float32, 0.01, 0.05)

    params = init_params(k_params)
    ref = reference_forward(throughput, DOD, V_av, C_0, R_0, n, params)

    # single time-chunk (T = 24 -> 3 groups -> fori group loop)
    out1 = neural_network_forward(throughput, DOD, V_av, C_0, R_0, n, params)
    out1 = jax.block_until_ready(out1)
    np.testing.assert_allclose(np.asarray(out1), np.asarray(ref), rtol=1e-4, atol=1e-5)
    assert out1.shape == (B, n + 1, 2)

    # multi-chunk path (2 chunks of 16 steps; state carried across chunks in VMEM scratch)
    out2 = neural_network_forward(throughput, DOD, V_av, C_0, R_0, n, params, chunk_t=16)
    out2 = jax.block_until_ready(out2)
    np.testing.assert_allclose(np.asarray(out2), np.asarray(ref), rtol=1e-4, atol=1e-5)

    print("KERNEL_OK")
</pallas_src>

<mosaic_0001>
module attributes {stable_mosaic.version = 11 : i64} {
  func.func @euler_mlp_kernel(%arg0: i32, %arg1: i32, %arg2: memref<24x8xf32, #tpu.memory_space<vmem>>, %arg3: memref<24x8xf32, #tpu.memory_space<vmem>>, %arg4: memref<16x8xf32, #tpu.memory_space<vmem>>, %arg5: memref<8x8xf32, #tpu.memory_space<vmem>>, %arg6: memref<16x8xf32, #tpu.memory_space<vmem>>, %arg7: memref<8x16xf32, #tpu.memory_space<vmem>>, %arg8: memref<8x1xf32, #tpu.memory_space<vmem>>, %arg9: memref<2x24x8xf32, #tpu.memory_space<vmem>>, %arg10: memref<8x8xf32, #tpu.memory_space<vmem>>) attributes {dimension_semantics = [#tpu.dimension_semantics<parallel>, #tpu.dimension_semantics<arbitrary>], iteration_bounds = array<i64: 1, 1>, scalar_prefetch = 0 : i64, scratch_operands = 1 : i64, tpu.core_type = #tpu.core_type<tc>, window_params = [{transform_indices = @transform_0, window_bounds = array<i64: 24, 8>}, {transform_indices = @transform_1, window_bounds = array<i64: 24, 8>}, {transform_indices = @transform_2, window_bounds = array<i64: 16, 8>}, {transform_indices = @transform_3, window_bounds = array<i64: 8, 8>}, {pipeline_mode = #tpu.pipeline_mode<synchronous>, transform_indices = @transform_4, window_bounds = array<i64: 16, 8>}, {pipeline_mode = #tpu.pipeline_mode<synchronous>, transform_indices = @transform_5, window_bounds = array<i64: 8, 16>}, {pipeline_mode = #tpu.pipeline_mode<synchronous>, transform_indices = @transform_6, window_bounds = array<i64: 8, 1>}, {transform_indices = @transform_7, window_bounds = array<i64: 2, 24, 8>}]} {
    %c0 = arith.constant 0 : index
    %c0_0 = arith.constant 0 : index
    %0 = vector.load %arg4[%c0, %c0_0] : memref<16x8xf32, #tpu.memory_space<vmem>>, vector<16x8xf32>
    %c0_1 = arith.constant 0 : index
    %c0_2 = arith.constant 0 : index
    %1 = vector.load %arg6[%c0_1, %c0_2] : memref<16x8xf32, #tpu.memory_space<vmem>>, vector<16x1xf32>
    %2 = vector.shape_cast %1 : vector<16x1xf32> to vector<16x1xf32>
    %3 = vector.broadcast %2 : vector<16x1xf32> to vector<16x8xf32>
    %c0_3 = arith.constant 0 : index
    %c1 = arith.constant 1 : index
    %4 = vector.load %arg6[%c0_3, %c1] : memref<16x8xf32, #tpu.memory_space<vmem>>, vector<16x1xf32>
    %5 = vector.shape_cast %4 : vector<16x1xf32> to vector<16x1xf32>
    %6 = vector.broadcast %5 : vector<16x1xf32> to vector<16x8xf32>
    %c0_4 = arith.constant 0 : index
    %c2 = arith.constant 2 : index
    %7 = vector.load %arg6[%c0_4, %c2] : memref<16x8xf32, #tpu.memory_space<vmem>>, vector<16x1xf32>
    %8 = vector.shape_cast %7 : vector<16x1xf32> to vector<16x1xf32>
    %9 = vector.broadcast %8 : vector<16x1xf32> to vector<16x8xf32>
    %c0_5 = arith.constant 0 : index
    %c0_6 = arith.constant 0 : index
    %10 = vector.load %arg7[%c0_5, %c0_6] : memref<8x16xf32, #tpu.memory_space<vmem>>, vector<8x1xf32>
    %11 = vector.shape_cast %10 : vector<8x1xf32> to vector<8x1xf32>
    %12 = vector.broadcast %11 : vector<8x1xf32> to vector<8x8xf32>
    %c0_7 = arith.constant 0 : index
    %c1_8 = arith.constant 1 : index
    %13 = vector.load %arg7[%c0_7, %c1_8] : memref<8x16xf32, #tpu.memory_space<vmem>>, vector<8x1xf32>
    %14 = vector.shape_cast %13 : vector<8x1xf32> to vector<8x1xf32>
    %15 = vector.broadcast %14 : vector<8x1xf32> to vector<8x8xf32>
    %c0_9 = arith.constant 0 : index
    %c2_10 = arith.constant 2 : index
    %16 = vector.load %arg7[%c0_9, %c2_10] : memref<8x16xf32, #tpu.memory_space<vmem>>, vector<8x1xf32>
    %17 = vector.shape_cast %16 : vector<8x1xf32> to vector<8x1xf32>
    %18 = vector.broadcast %17 : vector<8x1xf32> to vector<8x8xf32>
    %c0_11 = arith.constant 0 : index
    %c3 = arith.constant 3 : index
    %19 = vector.load %arg7[%c0_11, %c3] : memref<8x16xf32, #tpu.memory_space<vmem>>, vector<8x1xf32>
    %20 = vector.shape_cast %19 : vector<8x1xf32> to vector<8x1xf32>
    %21 = vector.broadcast %20 : vector<8x1xf32> to vector<8x8xf32>
    %c0_12 = arith.constant 0 : index
    %c4 = arith.constant 4 : index
    %22 = vector.load %arg7[%c0_12, %c4] : memref<8x16xf32, #tpu.memory_space<vmem>>, vector<8x1xf32>
    %23 = vector.shape_cast %22 : vector<8x1xf32> to vector<8x1xf32>
    %24 = vector.broadcast %23 : vector<8x1xf32> to vector<8x8xf32>
    %c0_13 = arith.constant 0 : index
    %c5 = arith.constant 5 : index
    %25 = vector.load %arg7[%c0_13, %c5] : memref<8x16xf32, #tpu.memory_space<vmem>>, vector<8x1xf32>
    %26 = vector.shape_cast %25 : vector<8x1xf32> to vector<8x1xf32>
    %27 = vector.broadcast %26 : vector<8x1xf32> to vector<8x8xf32>
    %c0_14 = arith.constant 0 : index
    %c6 = arith.constant 6 : index
    %28 = vector.load %arg7[%c0_14, %c6] : memref<8x16xf32, #tpu.memory_space<vmem>>, vector<8x1xf32>
    %29 = vector.shape_cast %28 : vector<8x1xf32> to vector<8x1xf32>
    %30 = vector.broadcast %29 : vector<8x1xf32> to vector<8x8xf32>
    %c0_15 = arith.constant 0 : index
    %c7 = arith.constant 7 : index
    %31 = vector.load %arg7[%c0_15, %c7] : memref<8x16xf32, #tpu.memory_space<vmem>>, vector<8x1xf32>
    %32 = vector.shape_cast %31 : vector<8x1xf32> to vector<8x1xf32>
    %33 = vector.broadcast %32 : vector<8x1xf32> to vector<8x8xf32>
    %c0_16 = arith.constant 0 : index
    %c8 = arith.constant 8 : index
    %34 = vector.load %arg7[%c0_16, %c8] : memref<8x16xf32, #tpu.memory_space<vmem>>, vector<8x1xf32>
    %35 = vector.shape_cast %34 : vector<8x1xf32> to vector<8x1xf32>
    %36 = vector.broadcast %35 : vector<8x1xf32> to vector<8x8xf32>
    %c0_17 = arith.constant 0 : index
    %c9 = arith.constant 9 : index
    %37 = vector.load %arg7[%c0_17, %c9] : memref<8x16xf32, #tpu.memory_space<vmem>>, vector<8x1xf32>
    %38 = vector.shape_cast %37 : vector<8x1xf32> to vector<8x1xf32>
    %39 = vector.broadcast %38 : vector<8x1xf32> to vector<8x8xf32>
    %c0_18 = arith.constant 0 : index
    %c0_19 = arith.constant 0 : index
    %40 = vector.load %arg8[%c0_18, %c0_19] : memref<8x1xf32, #tpu.memory_space<vmem>>, vector<8x1xf32>
    %41 = vector.shape_cast %40 : vector<8x1xf32> to vector<8x1xf32>
    %42 = vector.broadcast %41 : vector<8x1xf32> to vector<8x8xf32>
    %c0_i32 = arith.constant 0 : i32
    %43 = arith.cmpi eq, %arg1, %c0_i32 : i32
    %44 = arith.extui %43 : i1 to i32
    %c0_i32_20 = arith.constant 0 : i32
    %45 = arith.cmpi ne, %44, %c0_i32_20 : i32
    scf.if %45 {
      %c0_27 = arith.constant 0 : index
      %c0_28 = arith.constant 0 : index
      %50 = vector.load %arg5[%c0_27, %c0_28] : memref<8x8xf32, #tpu.memory_space<vmem>>, vector<8x8xf32>
      %c0_29 = arith.constant 0 : index
      %c0_30 = arith.constant 0 : index
      %51 = vector.load %arg10[%c0_29, %c0_30] : memref<8x8xf32, #tpu.memory_space<vmem>>, vector<8x8xf32>
      tpu.vector_store %arg10[%c0_29, %c0_30], %50 {strides = array<i32>} : memref<8x8xf32, #tpu.memory_space<vmem>>, vector<8x8xf32>,
    } else {
    }
    %c0_21 = arith.constant 0 : index
    %c0_22 = arith.constant 0 : index
    %46 = vector.load %arg10[%c0_21, %c0_22] : memref<8x8xf32, #tpu.memory_space<vmem>>, vector<8x8xf32>
    %c0_i32_23 = arith.constant 0 : i32
    %c3_i32 = arith.constant 3 : i32
    %47 = arith.addi %c0_i32_23, %c3_i32 : i32
    %c1_i32 = arith.constant 1 : i32
    %48 = scf.for %arg11 = %c0_i32_23 to %47 step %c1_i32 iter_args(%arg12 = %46) -> (vector<8x8xf32>)  : i32 {
      %c8_i32 = arith.constant 8 : i32
      %50 = arith.muli %arg11, %c8_i32 : i32
      %51 = tpu.assume_multiple %50, 8 : i32
      %52 = arith.index_cast %51 : i32 to index
      %c0_27 = arith.constant 0 : index
      %53 = vector.load %arg2[%52, %c0_27] : memref<24x8xf32, #tpu.memory_space<vmem>>, vector<8x8xf32>
      %54 = arith.index_cast %51 : i32 to index
      %c0_28 = arith.constant 0 : index
      %55 = vector.load %arg3[%54, %c0_28] : memref<24x8xf32, #tpu.memory_space<vmem>>, vector<8x8xf32>
      %56 = vector.extract_strided_slice %55 {offsets = [0, 0], sizes = [1, 8], strides = [1, 1]} : vector<8x8xf32> to vector<1x8xf32>
      %57 = vector.broadcast %56 : vector<1x8xf32> to vector<16x8xf32>
      %58 = arith.mulf %3, %57 : vector<16x8xf32>
      %59 = arith.addf %0, %58 : vector<16x8xf32>
      %60 = vector.extract_strided_slice %arg12 {offsets = [0, 0], sizes = [1, 8], strides = [1, 1]} : vector<8x8xf32> to vector<1x8xf32>
      %61 = vector.broadcast %60 : vector<1x8xf32> to vector<16x8xf32>
      %62 = arith.mulf %6, %61 : vector<16x8xf32>
      %63 = vector.extract_strided_slice %arg12 {offsets = [1, 0], sizes = [1, 8], strides = [1, 1]} : vector<8x8xf32> to vector<1x8xf32>
      %64 = vector.broadcast %63 : vector<1x8xf32> to vector<16x8xf32>
      %65 = arith.mulf %9, %64 : vector<16x8xf32>
      %66 = arith.addf %62, %65 : vector<16x8xf32>
      %67 = arith.addf %59, %66 : vector<16x8xf32>
      %68 = math.tanh %67 : vector<16x8xf32>
      %69 = vector.extract_strided_slice %68 {offsets = [0, 0], sizes = [1, 8], strides = [1, 1]} : vector<16x8xf32> to vector<1x8xf32>
      %70 = vector.broadcast %69 : vector<1x8xf32> to vector<8x8xf32>
      %71 = arith.mulf %12, %70 : vector<8x8xf32>
      %72 = vector.extract_strided_slice %68 {offsets = [1, 0], sizes = [1, 8], strides = [1, 1]} : vector<16x8xf32> to vector<1x8xf32>
      %73 = vector.broadcast %72 : vector<1x8xf32> to vector<8x8xf32>
      %74 = arith.mulf %15, %73 : vector<8x8xf32>
      %75 = vector.extract_strided_slice %68 {offsets = [2, 0], sizes = [1, 8], strides = [1, 1]} : vector<16x8xf32> to vector<1x8xf32>
      %76 = vector.broadcast %75 : vector<1x8xf32> to vector<8x8xf32>
      %77 = arith.mulf %18, %76 : vector<8x8xf32>
      %78 = vector.extract_strided_slice %68 {offsets = [3, 0], sizes = [1, 8], strides = [1, 1]} : vector<16x8xf32> to vector<1x8xf32>
      %79 = vector.broadcast %78 : vector<1x8xf32> to vector<8x8xf32>
      %80 = arith.mulf %21, %79 : vector<8x8xf32>
      %81 = vector.extract_strided_slice %68 {offsets = [4, 0], sizes = [1, 8], strides = [1, 1]} : vector<16x8xf32> to vector<1x8xf32>
      %82 = vector.broadcast %81 : vector<1x8xf32> to vector<8x8xf32>
      %83 = arith.mulf %24, %82 : vector<8x8xf32>
      %84 = vector.extract_strided_slice %68 {offsets = [5, 0], sizes = [1, 8], strides = [1, 1]} : vector<16x8xf32> to vector<1x8xf32>
      %85 = vector.broadcast %84 : vector<1x8xf32> to vector<8x8xf32>
      %86 = arith.mulf %27, %85 : vector<8x8xf32>
      %87 = vector.extract_strided_slice %68 {offsets = [6, 0], sizes = [1, 8], strides = [1, 1]} : vector<16x8xf32> to vector<1x8xf32>
      %88 = vector.broadcast %87 : vector<1x8xf32> to vector<8x8xf32>
      %89 = arith.mulf %30, %88 : vector<8x8xf32>
      %90 = vector.extract_strided_slice %68 {offsets = [7, 0], sizes = [1, 8], strides = [1, 1]} : vector<16x8xf32> to vector<1x8xf32>
      %91 = vector.broadcast %90 : vector<1x8xf32> to vector<8x8xf32>
      %92 = arith.mulf %33, %91 : vector<8x8xf32>
      %93 = vector.extract_strided_slice %68 {offsets = [8, 0], sizes = [1, 8], strides = [1, 1]} : vector<16x8xf32> to vector<1x8xf32>
      %94 = vector.broadcast %93 : vector<1x8xf32> to vector<8x8xf32>
      %95 = arith.mulf %36, %94 : vector<8x8xf32>
      %96 = vector.extract_strided_slice %68 {offsets = [9, 0], sizes = [1, 8], strides = [1, 1]} : vector<16x8xf32> to vector<1x8xf32>
      %97 = vector.broadcast %96 : vector<1x8xf32> to vector<8x8xf32>
      %98 = arith.mulf %39, %97 : vector<8x8xf32>
      %99 = arith.addf %71, %74 : vector<8x8xf32>
      %100 = arith.addf %77, %80 : vector<8x8xf32>
      %101 = arith.addf %83, %86 : vector<8x8xf32>
      %102 = arith.addf %89, %92 : vector<8x8xf32>
      %103 = arith.addf %95, %98 : vector<8x8xf32>
      %104 = arith.addf %99, %100 : vector<8x8xf32>
      %105 = arith.addf %101, %102 : vector<8x8xf32>
      %106 = arith.addf %103, %42 : vector<8x8xf32>
      %107 = arith.addf %104, %105 : vector<8x8xf32>
      %108 = arith.addf %107, %106 : vector<8x8xf32>
      %109 = vector.extract_strided_slice %53 {offsets = [0, 0], sizes = [1, 8], strides = [1, 1]} : vector<8x8xf32> to vector<1x8xf32>
      %110 = vector.broadcast %109 : vector<1x8xf32> to vector<8x8xf32>
      %111 = arith.mulf %110, %108 : vector<8x8xf32>
      %112 = arith.addf %arg12, %111 : vector<8x8xf32>
      %113 = vector.extract_strided_slice %55 {offsets = [1, 0], sizes = [1, 8], strides = [1, 1]} : vector<8x8xf32> to vector<1x8xf32>
      %114 = vector.broadcast %113 : vector<1x8xf32> to vector<16x8xf32>
      %115 = arith.mulf %3, %114 : vector<16x8xf32>
      %116 = arith.addf %0, %115 : vector<16x8xf32>
      %117 = vector.extract_strided_slice %112 {offsets = [0, 0], sizes = [1, 8], strides = [1, 1]} : vector<8x8xf32> to vector<1x8xf32>
      %118 = vector.broadcast %117 : vector<1x8xf32> to vector<16x8xf32>
      %119 = arith.mulf %6, %118 : vector<16x8xf32>
      %120 = vector.extract_strided_slice %112 {offsets = [1, 0], sizes = [1, 8], strides = [1, 1]} : vector<8x8xf32> to vector<1x8xf32>
      %121 = vector.broadcast %120 : vector<1x8xf32> to vector<16x8xf32>
      %122 = arith.mulf %9, %121 : vector<16x8xf32>
      %123 = arith.addf %119, %122 : vector<16x8xf32>
      %124 = arith.addf %116, %123 : vector<16x8xf32>
      %125 = math.tanh %124 : vector<16x8xf32>
      %126 = vector.extract_strided_slice %125 {offsets = [0, 0], sizes = [1, 8], strides = [1, 1]} : vector<16x8xf32> to vector<1x8xf32>
      %127 = vector.broadcast %126 : vector<1x8xf32> to vector<8x8xf32>
      %128 = arith.mulf %12, %127 : vector<8x8xf32>
      %129 = vector.extract_strided_slice %125 {offsets = [1, 0], sizes = [1, 8], strides = [1, 1]} : vector<16x8xf32> to vector<1x8xf32>
      %130 = vector.broadcast %129 : vector<1x8xf32> to vector<8x8xf32>
      %131 = arith.mulf %15, %130 : vector<8x8xf32>
      %132 = vector.extract_strided_slice %125 {offsets = [2, 0], sizes = [1, 8], strides = [1, 1]} : vector<16x8xf32> to vector<1x8xf32>
      %133 = vector.broadcast %132 : vector<1x8xf32> to vector<8x8xf32>
      %134 = arith.mulf %18, %133 : vector<8x8xf32>
      %135 = vector.extract_strided_slice %125 {offsets = [3, 0], sizes = [1, 8], strides = [1, 1]} : vector<16x8xf32> to vector<1x8xf32>
      %136 = vector.broadcast %135 : vector<1x8xf32> to vector<8x8xf32>
      %137 = arith.mulf %21, %136 : vector<8x8xf32>
      %138 = vector.extract_strided_slice %125 {offsets = [4, 0], sizes = [1, 8], strides = [1, 1]} : vector<16x8xf32> to vector<1x8xf32>
      %139 = vector.broadcast %138 : vector<1x8xf32> to vector<8x8xf32>
      %140 = arith.mulf %24, %139 : vector<8x8xf32>
      %141 = vector.extract_strided_slice %125 {offsets = [5, 0], sizes = [1, 8], strides = [1, 1]} : vector<16x8xf32> to vector<1x8xf32>
      %142 = vector.broadcast %141 : vector<1x8xf32> to vector<8x8xf32>
      %143 = arith.mulf %27, %142 : vector<8x8xf32>
      %144 = vector.extract_strided_slice %125 {offsets = [6, 0], sizes = [1, 8], strides = [1, 1]} : vector<16x8xf32> to vector<1x8xf32>
      %145 = vector.broadcast %144 : vector<1x8xf32> to vector<8x8xf32>
      %146 = arith.mulf %30, %145 : vector<8x8xf32>
      %147 = vector.extract_strided_slice %125 {offsets = [7, 0], sizes = [1, 8], strides = [1, 1]} : vector<16x8xf32> to vector<1x8xf32>
      %148 = vector.broadcast %147 : vector<1x8xf32> to vector<8x8xf32>
      %149 = arith.mulf %33, %148 : vector<8x8xf32>
      %150 = vector.extract_strided_slice %125 {offsets = [8, 0], sizes = [1, 8], strides = [1, 1]} : vector<16x8xf32> to vector<1x8xf32>
      %151 = vector.broadcast %150 : vector<1x8xf32> to vector<8x8xf32>
      %152 = arith.mulf %36, %151 : vector<8x8xf32>
      %153 = vector.extract_strided_slice %125 {offsets = [9, 0], sizes = [1, 8], strides = [1, 1]} : vector<16x8xf32> to vector<1x8xf32>
      %154 = vector.broadcast %153 : vector<1x8xf32> to vector<8x8xf32>
      %155 = arith.mulf %39, %154 : vector<8x8xf32>
      %156 = arith.addf %128, %131 : vector<8x8xf32>
      %157 = arith.addf %134, %137 : vector<8x8xf32>
      %158 = arith.addf %140, %143 : vector<8x8xf32>
      %159 = arith.addf %146, %149 : vector<8x8xf32>
      %160 = arith.addf %152, %155 : vector<8x8xf32>
      %161 = arith.addf %156, %157 : vector<8x8xf32>
      %162 = arith.addf %158, %159 : vector<8x8xf32>
      %163 = arith.addf %160, %42 : vector<8x8xf32>
      %164 = arith.addf %161, %162 : vector<8x8xf32>
      %165 = arith.addf %164, %163 : vector<8x8xf32>
      %166 = vector.extract_strided_slice %53 {offsets = [1, 0], sizes = [1, 8], strides = [1, 1]} : vector<8x8xf32> to vector<1x8xf32>
      %167 = vector.broadcast %166 : vector<1x8xf32> to vector<8x8xf32>
      %168 = arith.mulf %167, %165 : vector<8x8xf32>
      %169 = arith.addf %112, %168 : vector<8x8xf32>
      %170 = vector.extract_strided_slice %55 {offsets = [2, 0], sizes = [1, 8], strides = [1, 1]} : vector<8x8xf32> to vector<1x8xf32>
      %171 = vector.broadcast %170 : vector<1x8xf32> to vector<16x8xf32>
      %172 = arith.mulf %3, %171 : vector<16x8xf32>
      %173 = arith.addf %0, %172 : vector<16x8xf32>
      %174 = vector.extract_strided_slice %169 {offsets = [0, 0], sizes = [1, 8], strides = [1, 1]} : vector<8x8xf32> to vector<1x8xf32>
      %175 = vector.broadcast %174 : vector<1x8xf32> to vector<16x8xf32>
      %176 = arith.mulf %6, %175 : vector<16x8xf32>
      %177 = vector.extract_strided_slice %169 {offsets = [1, 0], sizes = [1, 8], strides = [1, 1]} : vector<8x8xf32> to vector<1x8xf32>
      %178 = vector.broadcast %177 : vector<1x8xf32> to vector<16x8xf32>
      %179 = arith.mulf %9, %178 : vector<16x8xf32>
      %180 = arith.addf %176, %179 : vector<16x8xf32>
      %181 = arith.addf %173, %180 : vector<16x8xf32>
      %182 = math.tanh %181 : vector<16x8xf32>
      %183 = vector.extract_strided_slice %182 {offsets = [0, 0], sizes = [1, 8], strides = [1, 1]} : vector<16x8xf32> to vector<1x8xf32>
      %184 = vector.broadcast %183 : vector<1x8xf32> to vector<8x8xf32>
      %185 = arith.mulf %12, %184 : vector<8x8xf32>
      %186 = vector.extract_strided_slice %182 {offsets = [1, 0], sizes = [1, 8], strides = [1, 1]} : vector<16x8xf32> to vector<1x8xf32>
      %187 = vector.broadcast %186 : vector<1x8xf32> to vector<8x8xf32>
      %188 = arith.mulf %15, %187 : vector<8x8xf32>
      %189 = vector.extract_strided_slice %182 {offsets = [2, 0], sizes = [1, 8], strides = [1, 1]} : vector<16x8xf32> to vector<1x8xf32>
      %190 = vector.broadcast %189 : vector<1x8xf32> to vector<8x8xf32>
      %191 = arith.mulf %18, %190 : vector<8x8xf32>
      %192 = vector.extract_strided_slice %182 {offsets = [3, 0], sizes = [1, 8], strides = [1, 1]} : vector<16x8xf32> to vector<1x8xf32>
      %193 = vector.broadcast %192 : vector<1x8xf32> to vector<8x8xf32>
      %194 = arith.mulf %21, %193 : vector<8x8xf32>
      %195 = vector.extract_strided_slice %182 {offsets = [4, 0], sizes = [1, 8], strides = [1, 1]} : vector<16x8xf32> to vector<1x8xf32>
      %196 = vector.broadcast %195 : vector<1x8xf32> to vector<8x8xf32>
      %197 = arith.mulf %24, %196 : vector<8x8xf32>
      %198 = vector.extract_strided_slice %182 {offsets = [5, 0], sizes = [1, 8], strides = [1, 1]} : vector<16x8xf32> to vector<1x8xf32>
      %199 = vector.broadcast %198 : vector<1x8xf32> to vector<8x8xf32>
      %200 = arith.mulf %27, %199 : vector<8x8xf32>
      %201 = vector.extract_strided_slice %182 {offsets = [6, 0], sizes = [1, 8], strides = [1, 1]} : vector<16x8xf32> to vector<1x8xf32>
      %202 = vector.broadcast %201 : vector<1x8xf32> to vector<8x8xf32>
      %203 = arith.mulf %30, %202 : vector<8x8xf32>
      %204 = vector.extract_strided_slice %182 {offsets = [7, 0], sizes = [1, 8], strides = [1, 1]} : vector<16x8xf32> to vector<1x8xf32>
      %205 = vector.broadcast %204 : vector<1x8xf32> to vector<8x8xf32>
      %206 = arith.mulf %33, %205 : vector<8x8xf32>
      %207 = vector.extract_strided_slice %182 {offsets = [8, 0], sizes = [1, 8], strides = [1, 1]} : vector<16x8xf32> to vector<1x8xf32>
      %208 = vector.broadcast %207 : vector<1x8xf32> to vector<8x8xf32>
      %209 = arith.mulf %36, %208 : vector<8x8xf32>
      %210 = vector.extract_strided_slice %182 {offsets = [9, 0], sizes = [1, 8], strides = [1, 1]} : vector<16x8xf32> to vector<1x8xf32>
      %211 = vector.broadcast %210 : vector<1x8xf32> to vector<8x8xf32>
      %212 = arith.mulf %39, %211 : vector<8x8xf32>
      %213 = arith.addf %185, %188 : vector<8x8xf32>
      %214 = arith.addf %191, %194 : vector<8x8xf32>
      %215 = arith.addf %197, %200 : vector<8x8xf32>
      %216 = arith.addf %203, %206 : vector<8x8xf32>
      %217 = arith.addf %209, %212 : vector<8x8xf32>
      %218 = arith.addf %213, %214 : vector<8x8xf32>
      %219 = arith.addf %215, %216 : vector<8x8xf32>
      %220 = arith.addf %217, %42 : vector<8x8xf32>
      %221 = arith.addf %218, %219 : vector<8x8xf32>
      %222 = arith.addf %221, %220 : vector<8x8xf32>
      %223 = vector.extract_strided_slice %53 {offsets = [2, 0], sizes = [1, 8], strides = [1, 1]} : vector<8x8xf32> to vector<1x8xf32>
      %224 = vector.broadcast %223 : vector<1x8xf32> to vector<8x8xf32>
      %225 = arith.mulf %224, %222 : vector<8x8xf32>
      %226 = arith.addf %169, %225 : vector<8x8xf32>
      %227 = vector.extract_strided_slice %55 {offsets = [3, 0], sizes = [1, 8], strides = [1, 1]} : vector<8x8xf32> to vector<1x8xf32>
      %228 = vector.broadcast %227 : vector<1x8xf32> to vector<16x8xf32>
      %229 = arith.mulf %3, %228 : vector<16x8xf32>
      %230 = arith.addf %0, %229 : vector<16x8xf32>
      %231 = vector.extract_strided_slice %226 {offsets = [0, 0], sizes = [1, 8], strides = [1, 1]} : vector<8x8xf32> to vector<1x8xf32>
      %232 = vector.broadcast %231 : vector<1x8xf32> to vector<16x8xf32>
      %233 = arith.mulf %6, %232 : vector<16x8xf32>
      %234 = vector.extract_strided_slice %226 {offsets = [1, 0], sizes = [1, 8], strides = [1, 1]} : vector<8x8xf32> to vector<1x8xf32>
      %235 = vector.broadcast %234 : vector<1x8xf32> to vector<16x8xf32>
      %236 = arith.mulf %9, %235 : vector<16x8xf32>
      %237 = arith.addf %233, %236 : vector<16x8xf32>
      %238 = arith.addf %230, %237 : vector<16x8xf32>
      %239 = math.tanh %238 : vector<16x8xf32>
      %240 = vector.extract_strided_slice %239 {offsets = [0, 0], sizes = [1, 8], strides = [1, 1]} : vector<16x8xf32> to vector<1x8xf32>
      %241 = vector.broadcast %240 : vector<1x8xf32> to vector<8x8xf32>
      %242 = arith.mulf %12, %241 : vector<8x8xf32>
      %243 = vector.extract_strided_slice %239 {offsets = [1, 0], sizes = [1, 8], strides = [1, 1]} : vector<16x8xf32> to vector<1x8xf32>
      %244 = vector.broadcast %243 : vector<1x8xf32> to vector<8x8xf32>
      %245 = arith.mulf %15, %244 : vector<8x8xf32>
      %246 = vector.extract_strided_slice %239 {offsets = [2, 0], sizes = [1, 8], strides = [1, 1]} : vector<16x8xf32> to vector<1x8xf32>
      %247 = vector.broadcast %246 : vector<1x8xf32> to vector<8x8xf32>
      %248 = arith.mulf %18, %247 : vector<8x8xf32>
      %249 = vector.extract_strided_slice %239 {offsets = [3, 0], sizes = [1, 8], strides = [1, 1]} : vector<16x8xf32> to vector<1x8xf32>
      %250 = vector.broadcast %249 : vector<1x8xf32> to vector<8x8xf32>
      %251 = arith.mulf %21, %250 : vector<8x8xf32>
      %252 = vector.extract_strided_slice %239 {offsets = [4, 0], sizes = [1, 8], strides = [1, 1]} : vector<16x8xf32> to vector<1x8xf32>
      %253 = vector.broadcast %252 : vector<1x8xf32> to vector<8x8xf32>
      %254 = arith.mulf %24, %253 : vector<8x8xf32>
      %255 = vector.extract_strided_slice %239 {offsets = [5, 0], sizes = [1, 8], strides = [1, 1]} : vector<16x8xf32> to vector<1x8xf32>
      %256 = vector.broadcast %255 : vector<1x8xf32> to vector<8x8xf32>
      %257 = arith.mulf %27, %256 : vector<8x8xf32>
      %258 = vector.extract_strided_slice %239 {offsets = [6, 0], sizes = [1, 8], strides = [1, 1]} : vector<16x8xf32> to vector<1x8xf32>
      %259 = vector.broadcast %258 : vector<1x8xf32> to vector<8x8xf32>
      %260 = arith.mulf %30, %259 : vector<8x8xf32>
      %261 = vector.extract_strided_slice %239 {offsets = [7, 0], sizes = [1, 8], strides = [1, 1]} : vector<16x8xf32> to vector<1x8xf32>
      %262 = vector.broadcast %261 : vector<1x8xf32> to vector<8x8xf32>
      %263 = arith.mulf %33, %262 : vector<8x8xf32>
      %264 = vector.extract_strided_slice %239 {offsets = [8, 0], sizes = [1, 8], strides = [1, 1]} : vector<16x8xf32> to vector<1x8xf32>
      %265 = vector.broadcast %264 : vector<1x8xf32> to vector<8x8xf32>
      %266 = arith.mulf %36, %265 : vector<8x8xf32>
      %267 = vector.extract_strided_slice %239 {offsets = [9, 0], sizes = [1, 8], strides = [1, 1]} : vector<16x8xf32> to vector<1x8xf32>
      %268 = vector.broadcast %267 : vector<1x8xf32> to vector<8x8xf32>
      %269 = arith.mulf %39, %268 : vector<8x8xf32>
      %270 = arith.addf %242, %245 : vector<8x8xf32>
      %271 = arith.addf %248, %251 : vector<8x8xf32>
      %272 = arith.addf %254, %257 : vector<8x8xf32>
      %273 = arith.addf %260, %263 : vector<8x8xf32>
      %274 = arith.addf %266, %269 : vector<8x8xf32>
      %275 = arith.addf %270, %271 : vector<8x8xf32>
      %276 = arith.addf %272, %273 : vector<8x8xf32>
      %277 = arith.addf %274, %42 : vector<8x8xf32>
      %278 = arith.addf %275, %276 : vector<8x8xf32>
      %279 = arith.addf %278, %277 : vector<8x8xf32>
      %280 = vector.extract_strided_slice %53 {offsets = [3, 0], sizes = [1, 8], strides = [1, 1]} : vector<8x8xf32> to vector<1x8xf32>
      %281 = vector.broadcast %280 : vector<1x8xf32> to vector<8x8xf32>
      %282 = arith.mulf %281, %279 : vector<8x8xf32>
      %283 = arith.addf %226, %282 : vector<8x8xf32>
      %284 = vector.extract_strided_slice %55 {offsets = [4, 0], sizes = [1, 8], strides = [1, 1]} : vector<8x8xf32> to vector<1x8xf32>
      %285 = vector.broadcast %284 : vector<1x8xf32> to vector<16x8xf32>
      %286 = arith.mulf %3, %285 : vector<16x8xf32>
      %287 = arith.addf %0, %286 : vector<16x8xf32>
      %288 = vector.extract_strided_slice %283 {offsets = [0, 0], sizes = [1, 8], strides = [1, 1]} : vector<8x8xf32> to vector<1x8xf32>
      %289 = vector.broadcast %288 : vector<1x8xf32> to vector<16x8xf32>
      %290 = arith.mulf %6, %289 : vector<16x8xf32>
      %291 = vector.extract_strided_slice %283 {offsets = [1, 0], sizes = [1, 8], strides = [1, 1]} : vector<8x8xf32> to vector<1x8xf32>
      %292 = vector.broadcast %291 : vector<1x8xf32> to vector<16x8xf32>
      %293 = arith.mulf %9, %292 : vector<16x8xf32>
      %294 = arith.addf %290, %293 : vector<16x8xf32>
      %295 = arith.addf %287, %294 : vector<16x8xf32>
      %296 = math.tanh %295 : vector<16x8xf32>
      %297 = vector.extract_strided_slice %296 {offsets = [0, 0], sizes = [1, 8], strides = [1, 1]} : vector<16x8xf32> to vector<1x8xf32>
      %298 = vector.broadcast %297 : vector<1x8xf32> to vector<8x8xf32>
      %299 = arith.mulf %12, %298 : vector<8x8xf32>
      %300 = vector.extract_strided_slice %296 {offsets = [1, 0], sizes = [1, 8], strides = [1, 1]} : vector<16x8xf32> to vector<1x8xf32>
      %301 = vector.broadcast %300 : vector<1x8xf32> to vector<8x8xf32>
      %302 = arith.mulf %15, %301 : vector<8x8xf32>
      %303 = vector.extract_strided_slice %296 {offsets = [2, 0], sizes = [1, 8], strides = [1, 1]} : vector<16x8xf32> to vector<1x8xf32>
      %304 = vector.broadcast %303 : vector<1x8xf32> to vector<8x8xf32>
      %305 = arith.mulf %18, %304 : vector<8x8xf32>
      %306 = vector.extract_strided_slice %296 {offsets = [3, 0], sizes = [1, 8], strides = [1, 1]} : vector<16x8xf32> to vector<1x8xf32>
      %307 = vector.broadcast %306 : vector<1x8xf32> to vector<8x8xf32>
      %308 = arith.mulf %21, %307 : vector<8x8xf32>
      %309 = vector.extract_strided_slice %296 {offsets = [4, 0], sizes = [1, 8], strides = [1, 1]} : vector<16x8xf32> to vector<1x8xf32>
      %310 = vector.broadcast %309 : vector<1x8xf32> to vector<8x8xf32>
      %311 = arith.mulf %24, %310 : vector<8x8xf32>
      %312 = vector.extract_strided_slice %296 {offsets = [5, 0], sizes = [1, 8], strides = [1, 1]} : vector<16x8xf32> to vector<1x8xf32>
      %313 = vector.broadcast %312 : vector<1x8xf32> to vector<8x8xf32>
      %314 = arith.mulf %27, %313 : vector<8x8xf32>
      %315 = vector.extract_strided_slice %296 {offsets = [6, 0], sizes = [1, 8], strides = [1, 1]} : vector<16x8xf32> to vector<1x8xf32>
      %316 = vector.broadcast %315 : vector<1x8xf32> to vector<8x8xf32>
      %317 = arith.mulf %30, %316 : vector<8x8xf32>
      %318 = vector.extract_strided_slice %296 {offsets = [7, 0], sizes = [1, 8], strides = [1, 1]} : vector<16x8xf32> to vector<1x8xf32>
      %319 = vector.broadcast %318 : vector<1x8xf32> to vector<8x8xf32>
      %320 = arith.mulf %33, %319 : vector<8x8xf32>
      %321 = vector.extract_strided_slice %296 {offsets = [8, 0], sizes = [1, 8], strides = [1, 1]} : vector<16x8xf32> to vector<1x8xf32>
      %322 = vector.broadcast %321 : vector<1x8xf32> to vector<8x8xf32>
      %323 = arith.mulf %36, %322 : vector<8x8xf32>
      %324 = vector.extract_strided_slice %296 {offsets = [9, 0], sizes = [1, 8], strides = [1, 1]} : vector<16x8xf32> to vector<1x8xf32>
      %325 = vector.broadcast %324 : vector<1x8xf32> to vector<8x8xf32>
      %326 = arith.mulf %39, %325 : vector<8x8xf32>
      %327 = arith.addf %299, %302 : vector<8x8xf32>
      %328 = arith.addf %305, %308 : vector<8x8xf32>
      %329 = arith.addf %311, %314 : vector<8x8xf32>
      %330 = arith.addf %317, %320 : vector<8x8xf32>
      %331 = arith.addf %323, %326 : vector<8x8xf32>
      %332 = arith.addf %327, %328 : vector<8x8xf32>
      %333 = arith.addf %329, %330 : vector<8x8xf32>
      %334 = arith.addf %331, %42 : vector<8x8xf32>
      %335 = arith.addf %332, %333 : vector<8x8xf32>
      %336 = arith.addf %335, %334 : vector<8x8xf32>
      %337 = vector.extract_strided_slice %53 {offsets = [4, 0], sizes = [1, 8], strides = [1, 1]} : vector<8x8xf32> to vector<1x8xf32>
      %338 = vector.broadcast %337 : vector<1x8xf32> to vector<8x8xf32>
      %339 = arith.mulf %338, %336 : vector<8x8xf32>
      %340 = arith.addf %283, %339 : vector<8x8xf32>
      %341 = vector.extract_strided_slice %55 {offsets = [5, 0], sizes = [1, 8], strides = [1, 1]} : vector<8x8xf32> to vector<1x8xf32>
      %342 = vector.broadcast %341 : vector<1x8xf32> to vector<16x8xf32>
      %343 = arith.mulf %3, %342 : vector<16x8xf32>
      %344 = arith.addf %0, %343 : vector<16x8xf32>
      %345 = vector.extract_strided_slice %340 {offsets = [0, 0], sizes = [1, 8], strides = [1, 1]} : vector<8x8xf32> to vector<1x8xf32>
      %346 = vector.broadcast %345 : vector<1x8xf32> to vector<16x8xf32>
      %347 = arith.mulf %6, %346 : vector<16x8xf32>
      %348 = vector.extract_strided_slice %340 {offsets = [1, 0], sizes = [1, 8], strides = [1, 1]} : vector<8x8xf32> to vector<1x8xf32>
      %349 = vector.broadcast %348 : vector<1x8xf32> to vector<16x8xf32>
      %350 = arith.mulf %9, %349 : vector<16x8xf32>
      %351 = arith.addf %347, %350 : vector<16x8xf32>
      %352 = arith.addf %344, %351 : vector<16x8xf32>
      %353 = math.tanh %352 : vector<16x8xf32>
      %354 = vector.extract_strided_slice %353 {offsets = [0, 0], sizes = [1, 8], strides = [1, 1]} : vector<16x8xf32> to vector<1x8xf32>
      %355 = vector.broadcast %354 : vector<1x8xf32> to vector<8x8xf32>
      %356 = arith.mulf %12, %355 : vector<8x8xf32>
      %357 = vector.extract_strided_slice %353 {offsets = [1, 0], sizes = [1, 8], strides = [1, 1]} : vector<16x8xf32> to vector<1x8xf32>
      %358 = vector.broadcast %357 : vector<1x8xf32> to vector<8x8xf32>
      %359 = arith.mulf %15, %358 : vector<8x8xf32>
      %360 = vector.extract_strided_slice %353 {offsets = [2, 0], sizes = [1, 8], strides = [1, 1]} : vector<16x8xf32> to vector<1x8xf32>
      %361 = vector.broadcast %360 : vector<1x8xf32> to vector<8x8xf32>
      %362 = arith.mulf %18, %361 : vector<8x8xf32>
      %363 = vector.extract_strided_slice %353 {offsets = [3, 0], sizes = [1, 8], strides = [1, 1]} : vector<16x8xf32> to vector<1x8xf32>
      %364 = vector.broadcast %363 : vector<1x8xf32> to vector<8x8xf32>
      %365 = arith.mulf %21, %364 : vector<8x8xf32>
      %366 = vector.extract_strided_slice %353 {offsets = [4, 0], sizes = [1, 8], strides = [1, 1]} : vector<16x8xf32> to vector<1x8xf32>
      %367 = vector.broadcast %366 : vector<1x8xf32> to vector<8x8xf32>
      %368 = arith.mulf %24, %367 : vector<8x8xf32>
      %369 = vector.extract_strided_slice %353 {offsets = [5, 0], sizes = [1, 8], strides = [1, 1]} : vector<16x8xf32> to vector<1x8xf32>
      %370 = vector.broadcast %369 : vector<1x8xf32> to vector<8x8xf32>
      %371 = arith.mulf %27, %370 : vector<8x8xf32>
      %372 = vector.extract_strided_slice %353 {offsets = [6, 0], sizes = [1, 8], strides = [1, 1]} : vector<16x8xf32> to vector<1x8xf32>
      %373 = vector.broadcast %372 : vector<1x8xf32> to vector<8x8xf32>
      %374 = arith.mulf %30, %373 : vector<8x8xf32>
      %375 = vector.extract_strided_slice %353 {offsets = [7, 0], sizes = [1, 8], strides = [1, 1]} : vector<16x8xf32> to vector<1x8xf32>
      %376 = vector.broadcast %375 : vector<1x8xf32> to vector<8x8xf32>
      %377 = arith.mulf %33, %376 : vector<8x8xf32>
      %378 = vector.extract_strided_slice %353 {offsets = [8, 0], sizes = [1, 8], strides = [1, 1]} : vector<16x8xf32> to vector<1x8xf32>
      %379 = vector.broadcast %378 : vector<1x8xf32> to vector<8x8xf32>
      %380 = arith.mulf %36, %379 : vector<8x8xf32>
      %381 = vector.extract_strided_slice %353 {offsets = [9, 0], sizes = [1, 8], strides = [1, 1]} : vector<16x8xf32> to vector<1x8xf32>
      %382 = vector.broadcast %381 : vector<1x8xf32> to vector<8x8xf32>
      %383 = arith.mulf %39, %382 : vector<8x8xf32>
      %384 = arith.addf %356, %359 : vector<8x8xf32>
      %385 = arith.addf %362, %365 : vector<8x8xf32>
      %386 = arith.addf %368, %371 : vector<8x8xf32>
      %387 = arith.addf %374, %377 : vector<8x8xf32>
      %388 = arith.addf %380, %383 : vector<8x8xf32>
      %389 = arith.addf %384, %385 : vector<8x8xf32>
      %390 = arith.addf %386, %387 : vector<8x8xf32>
      %391 = arith.addf %388, %42 : vector<8x8xf32>
      %392 = arith.addf %389, %390 : vector<8x8xf32>
      %393 = arith.addf %392, %391 : vector<8x8xf32>
      %394 = vector.extract_strided_slice %53 {offsets = [5, 0], sizes = [1, 8], strides = [1, 1]} : vector<8x8xf32> to vector<1x8xf32>
      %395 = vector.broadcast %394 : vector<1x8xf32> to vector<8x8xf32>
      %396 = arith.mulf %395, %393 : vector<8x8xf32>
      %397 = arith.addf %340, %396 : vector<8x8xf32>
      %398 = vector.extract_strided_slice %55 {offsets = [6, 0], sizes = [1, 8], strides = [1, 1]} : vector<8x8xf32> to vector<1x8xf32>
      %399 = vector.broadcast %398 : vector<1x8xf32> to vector<16x8xf32>
      %400 = arith.mulf %3, %399 : vector<16x8xf32>
      %401 = arith.addf %0, %400 : vector<16x8xf32>
      %402 = vector.extract_strided_slice %397 {offsets = [0, 0], sizes = [1, 8], strides = [1, 1]} : vector<8x8xf32> to vector<1x8xf32>
      %403 = vector.broadcast %402 : vector<1x8xf32> to vector<16x8xf32>
      %404 = arith.mulf %6, %403 : vector<16x8xf32>
      %405 = vector.extract_strided_slice %397 {offsets = [1, 0], sizes = [1, 8], strides = [1, 1]} : vector<8x8xf32> to vector<1x8xf32>
      %406 = vector.broadcast %405 : vector<1x8xf32> to vector<16x8xf32>
      %407 = arith.mulf %9, %406 : vector<16x8xf32>
      %408 = arith.addf %404, %407 : vector<16x8xf32>
      %409 = arith.addf %401, %408 : vector<16x8xf32>
      %410 = math.tanh %409 : vector<16x8xf32>
      %411 = vector.extract_strided_slice %410 {offsets = [0, 0], sizes = [1, 8], strides = [1, 1]} : vector<16x8xf32> to vector<1x8xf32>
      %412 = vector.broadcast %411 : vector<1x8xf32> to vector<8x8xf32>
      %413 = arith.mulf %12, %412 : vector<8x8xf32>
      %414 = vector.extract_strided_slice %410 {offsets = [1, 0], sizes = [1, 8], strides = [1, 1]} : vector<16x8xf32> to vector<1x8xf32>
      %415 = vector.broadcast %414 : vector<1x8xf32> to vector<8x8xf32>
      %416 = arith.mulf %15, %415 : vector<8x8xf32>
      %417 = vector.extract_strided_slice %410 {offsets = [2, 0], sizes = [1, 8], strides = [1, 1]} : vector<16x8xf32> to vector<1x8xf32>
      %418 = vector.broadcast %417 : vector<1x8xf32> to vector<8x8xf32>
      %419 = arith.mulf %18, %418 : vector<8x8xf32>
      %420 = vector.extract_strided_slice %410 {offsets = [3, 0], sizes = [1, 8], strides = [1, 1]} : vector<16x8xf32> to vector<1x8xf32>
      %421 = vector.broadcast %420 : vector<1x8xf32> to vector<8x8xf32>
      %422 = arith.mulf %21, %421 : vector<8x8xf32>
      %423 = vector.extract_strided_slice %410 {offsets = [4, 0], sizes = [1, 8], strides = [1, 1]} : vector<16x8xf32> to vector<1x8xf32>
      %424 = vector.broadcast %423 : vector<1x8xf32> to vector<8x8xf32>
      %425 = arith.mulf %24, %424 : vector<8x8xf32>
      %426 = vector.extract_strided_slice %410 {offsets = [5, 0], sizes = [1, 8], strides = [1, 1]} : vector<16x8xf32> to vector<1x8xf32>
      %427 = vector.broadcast %426 : vector<1x8xf32> to vector<8x8xf32>
      %428 = arith.mulf %27, %427 : vector<8x8xf32>
      %429 = vector.extract_strided_slice %410 {offsets = [6, 0], sizes = [1, 8], strides = [1, 1]} : vector<16x8xf32> to vector<1x8xf32>
      %430 = vector.broadcast %429 : vector<1x8xf32> to vector<8x8xf32>
      %431 = arith.mulf %30, %430 : vector<8x8xf32>
      %432 = vector.extract_strided_slice %410 {offsets = [7, 0], sizes = [1, 8], strides = [1, 1]} : vector<16x8xf32> to vector<1x8xf32>
      %433 = vector.broadcast %432 : vector<1x8xf32> to vector<8x8xf32>
      %434 = arith.mulf %33, %433 : vector<8x8xf32>
      %435 = vector.extract_strided_slice %410 {offsets = [8, 0], sizes = [1, 8], strides = [1, 1]} : vector<16x8xf32> to vector<1x8xf32>
      %436 = vector.broadcast %435 : vector<1x8xf32> to vector<8x8xf32>
      %437 = arith.mulf %36, %436 : vector<8x8xf32>
      %438 = vector.extract_strided_slice %410 {offsets = [9, 0], sizes = [1, 8], strides = [1, 1]} : vector<16x8xf32> to vector<1x8xf32>
      %439 = vector.broadcast %438 : vector<1x8xf32> to vector<8x8xf32>
      %440 = arith.mulf %39, %439 : vector<8x8xf32>
      %441 = arith.addf %413, %416 : vector<8x8xf32>
      %442 = arith.addf %419, %422 : vector<8x8xf32>
      %443 = arith.addf %425, %428 : vector<8x8xf32>
      %444 = arith.addf %431, %434 : vector<8x8xf32>
      %445 = arith.addf %437, %440 : vector<8x8xf32>
      %446 = arith.addf %441, %442 : vector<8x8xf32>
      %447 = arith.addf %443, %444 : vector<8x8xf32>
      %448 = arith.addf %445, %42 : vector<8x8xf32>
      %449 = arith.addf %446, %447 : vector<8x8xf32>
      %450 = arith.addf %449, %448 : vector<8x8xf32>
      %451 = vector.extract_strided_slice %53 {offsets = [6, 0], sizes = [1, 8], strides = [1, 1]} : vector<8x8xf32> to vector<1x8xf32>
      %452 = vector.broadcast %451 : vector<1x8xf32> to vector<8x8xf32>
      %453 = arith.mulf %452, %450 : vector<8x8xf32>
      %454 = arith.addf %397, %453 : vector<8x8xf32>
      %455 = vector.extract_strided_slice %55 {offsets = [7, 0], sizes = [1, 8], strides = [1, 1]} : vector<8x8xf32> to vector<1x8xf32>
      %456 = vector.broadcast %455 : vector<1x8xf32> to vector<16x8xf32>
      %457 = arith.mulf %3, %456 : vector<16x8xf32>
      %458 = arith.addf %0, %457 : vector<16x8xf32>
      %459 = vector.extract_strided_slice %454 {offsets = [0, 0], sizes = [1, 8], strides = [1, 1]} : vector<8x8xf32> to vector<1x8xf32>
      %460 = vector.broadcast %459 : vector<1x8xf32> to vector<16x8xf32>
      %461 = arith.mulf %6, %460 : vector<16x8xf32>
      %462 = vector.extract_strided_slice %454 {offsets = [1, 0], sizes = [1, 8], strides = [1, 1]} : vector<8x8xf32> to vector<1x8xf32>
      %463 = vector.broadcast %462 : vector<1x8xf32> to vector<16x8xf32>
      %464 = arith.mulf %9, %463 : vector<16x8xf32>
      %465 = arith.addf %461, %464 : vector<16x8xf32>
      %466 = arith.addf %458, %465 : vector<16x8xf32>
      %467 = math.tanh %466 : vector<16x8xf32>
      %468 = vector.extract_strided_slice %467 {offsets = [0, 0], sizes = [1, 8], strides = [1, 1]} : vector<16x8xf32> to vector<1x8xf32>
      %469 = vector.broadcast %468 : vector<1x8xf32> to vector<8x8xf32>
      %470 = arith.mulf %12, %469 : vector<8x8xf32>
      %471 = vector.extract_strided_slice %467 {offsets = [1, 0], sizes = [1, 8], strides = [1, 1]} : vector<16x8xf32> to vector<1x8xf32>
      %472 = vector.broadcast %471 : vector<1x8xf32> to vector<8x8xf32>
      %473 = arith.mulf %15, %472 : vector<8x8xf32>
      %474 = vector.extract_strided_slice %467 {offsets = [2, 0], sizes = [1, 8], strides = [1, 1]} : vector<16x8xf32> to vector<1x8xf32>
      %475 = vector.broadcast %474 : vector<1x8xf32> to vector<8x8xf32>
      %476 = arith.mulf %18, %475 : vector<8x8xf32>
      %477 = vector.extract_strided_slice %467 {offsets = [3, 0], sizes = [1, 8], strides = [1, 1]} : vector<16x8xf32> to vector<1x8xf32>
      %478 = vector.broadcast %477 : vector<1x8xf32> to vector<8x8xf32>
      %479 = arith.mulf %21, %478 : vector<8x8xf32>
      %480 = vector.extract_strided_slice %467 {offsets = [4, 0], sizes = [1, 8], strides = [1, 1]} : vector<16x8xf32> to vector<1x8xf32>
      %481 = vector.broadcast %480 : vector<1x8xf32> to vector<8x8xf32>
      %482 = arith.mulf %24, %481 : vector<8x8xf32>
      %483 = vector.extract_strided_slice %467 {offsets = [5, 0], sizes = [1, 8], strides = [1, 1]} : vector<16x8xf32> to vector<1x8xf32>
      %484 = vector.broadcast %483 : vector<1x8xf32> to vector<8x8xf32>
      %485 = arith.mulf %27, %484 : vector<8x8xf32>
      %486 = vector.extract_strided_slice %467 {offsets = [6, 0], sizes = [1, 8], strides = [1, 1]} : vector<16x8xf32> to vector<1x8xf32>
      %487 = vector.broadcast %486 : vector<1x8xf32> to vector<8x8xf32>
      %488 = arith.mulf %30, %487 : vector<8x8xf32>
      %489 = vector.extract_strided_slice %467 {offsets = [7, 0], sizes = [1, 8], strides = [1, 1]} : vector<16x8xf32> to vector<1x8xf32>
      %490 = vector.broadcast %489 : vector<1x8xf32> to vector<8x8xf32>
      %491 = arith.mulf %33, %490 : vector<8x8xf32>
      %492 = vector.extract_strided_slice %467 {offsets = [8, 0], sizes = [1, 8], strides = [1, 1]} : vector<16x8xf32> to vector<1x8xf32>
      %493 = vector.broadcast %492 : vector<1x8xf32> to vector<8x8xf32>
      %494 = arith.mulf %36, %493 : vector<8x8xf32>
      %495 = vector.extract_strided_slice %467 {offsets = [9, 0], sizes = [1, 8], strides = [1, 1]} : vector<16x8xf32> to vector<1x8xf32>
      %496 = vector.broadcast %495 : vector<1x8xf32> to vector<8x8xf32>
      %497 = arith.mulf %39, %496 : vector<8x8xf32>
      %498 = arith.addf %470, %473 : vector<8x8xf32>
      %499 = arith.addf %476, %479 : vector<8x8xf32>
      %500 = arith.addf %482, %485 : vector<8x8xf32>
      %501 = arith.addf %488, %491 : vector<8x8xf32>
      %502 = arith.addf %494, %497 : vector<8x8xf32>
      %503 = arith.addf %498, %499 : vector<8x8xf32>
      %504 = arith.addf %500, %501 : vector<8x8xf32>
      %505 = arith.addf %502, %42 : vector<8x8xf32>
      %506 = arith.addf %503, %504 : vector<8x8xf32>
      %507 = arith.addf %506, %505 : vector<8x8xf32>
      %508 = vector.extract_strided_slice %53 {offsets = [7, 0], sizes = [1, 8], strides = [1, 1]} : vector<8x8xf32> to vector<1x8xf32>
      %509 = vector.broadcast %508 : vector<1x8xf32> to vector<8x8xf32>
      %510 = arith.mulf %509, %507 : vector<8x8xf32>
      %511 = arith.addf %454, %510 : vector<8x8xf32>
      %512 = vector.extract_strided_slice %112 {offsets = [0, 0], sizes = [1, 8], strides = [1, 1]} : vector<8x8xf32> to vector<1x8xf32>
      %513 = vector.extract_strided_slice %169 {offsets = [0, 0], sizes = [1, 8], strides = [1, 1]} : vector<8x8xf32> to vector<1x8xf32>
      %514 = vector.extract_strided_slice %226 {offsets = [0, 0], sizes = [1, 8], strides = [1, 1]} : vector<8x8xf32> to vector<1x8xf32>
      %515 = vector.extract_strided_slice %283 {offsets = [0, 0], sizes = [1, 8], strides = [1, 1]} : vector<8x8xf32> to vector<1x8xf32>
      %516 = vector.extract_strided_slice %340 {offsets = [0, 0], sizes = [1, 8], strides = [1, 1]} : vector<8x8xf32> to vector<1x8xf32>
      %517 = vector.extract_strided_slice %397 {offsets = [0, 0], sizes = [1, 8], strides = [1, 1]} : vector<8x8xf32> to vector<1x8xf32>
      %518 = vector.extract_strided_slice %454 {offsets = [0, 0], sizes = [1, 8], strides = [1, 1]} : vector<8x8xf32> to vector<1x8xf32>
      %519 = vector.extract_strided_slice %511 {offsets = [0, 0], sizes = [1, 8], strides = [1, 1]} : vector<8x8xf32> to vector<1x8xf32>
      %520 = tpu.concatenate %512, %513, %514, %515, %516, %517, %518, %519 in 0 : vector<1x8xf32>, vector<1x8xf32>, vector<1x8xf32>, vector<1x8xf32>, vector<1x8xf32>, vector<1x8xf32>, vector<1x8xf32>, vector<1x8xf32> -> vector<8x8xf32>
      %c0_29 = arith.constant 0 : index
      %521 = arith.index_cast %51 : i32 to index
      %c0_30 = arith.constant 0 : index
      %522 = vector.load %arg9[%c0_29, %521, %c0_30] : memref<2x24x8xf32, #tpu.memory_space<vmem>>, vector<1x8x8xf32>
      %523 = vector.shape_cast %522 : vector<1x8x8xf32> to vector<8x8xf32>
      %524 = vector.shape_cast %520 : vector<8x8xf32> to vector<1x8x8xf32>
      tpu.vector_store %arg9[%c0_29, %521, %c0_30], %524 {strides = array<i32>} : memref<2x24x8xf32, #tpu.memory_space<vmem>>, vector<1x8x8xf32>,
      %525 = vector.extract_strided_slice %112 {offsets = [1, 0], sizes = [1, 8], strides = [1, 1]} : vector<8x8xf32> to vector<1x8xf32>
      %526 = vector.extract_strided_slice %169 {offsets = [1, 0], sizes = [1, 8], strides = [1, 1]} : vector<8x8xf32> to vector<1x8xf32>
      %527 = vector.extract_strided_slice %226 {offsets = [1, 0], sizes = [1, 8], strides = [1, 1]} : vector<8x8xf32> to vector<1x8xf32>
      %528 = vector.extract_strided_slice %283 {offsets = [1, 0], sizes = [1, 8], strides = [1, 1]} : vector<8x8xf32> to vector<1x8xf32>
      %529 = vector.extract_strided_slice %340 {offsets = [1, 0], sizes = [1, 8], strides = [1, 1]} : vector<8x8xf32> to vector<1x8xf32>
      %530 = vector.extract_strided_slice %397 {offsets = [1, 0], sizes = [1, 8], strides = [1, 1]} : vector<8x8xf32> to vector<1x8xf32>
      %531 = vector.extract_strided_slice %454 {offsets = [1, 0], sizes = [1, 8], strides = [1, 1]} : vector<8x8xf32> to vector<1x8xf32>
      %532 = vector.extract_strided_slice %511 {offsets = [1, 0], sizes = [1, 8], strides = [1, 1]} : vector<8x8xf32> to vector<1x8xf32>
      %533 = tpu.concatenate %525, %526, %527, %528, %529, %530, %531, %532 in 0 : vector<1x8xf32>, vector<1x8xf32>, vector<1x8xf32>, vector<1x8xf32>, vector<1x8xf32>, vector<1x8xf32>, vector<1x8xf32>, vector<1x8xf32> -> vector<8x8xf32>
      %c1_31 = arith.constant 1 : index
      %534 = arith.index_cast %51 : i32 to index
      %c0_32 = arith.constant 0 : index
      %535 = vector.load %arg9[%c1_31, %534, %c0_32] : memref<2x24x8xf32, #tpu.memory_space<vmem>>, vector<1x8x8xf32>
      %536 = vector.shape_cast %535 : vector<1x8x8xf32> to vector<8x8xf32>
      %537 = vector.shape_cast %533 : vector<8x8xf32> to vector<1x8x8xf32>
      tpu.vector_store %arg9[%c1_31, %534, %c0_32], %537 {strides = array<i32>} : memref<2x24x8xf32, #tpu.memory_space<vmem>>, vector<1x8x8xf32>,
      scf.yield %511 : vector<8x8xf32>
    }
    %c3_i32_24 = arith.constant 3 : i32
    %c0_25 = arith.constant 0 : index
    %c0_26 = arith.constant 0 : index
    %49 = vector.load %arg10[%c0_25, %c0_26] : memref<8x8xf32, #tpu.memory_space<vmem>>, vector<8x8xf32>
    tpu.vector_store %arg10[%c0_25, %c0_26], %48 {strides = array<i32>} : memref<8x8xf32, #tpu.memory_space<vmem>>, vector<8x8xf32>,
    return
  }
  func.func @transform_0(%arg0: i32, %arg1: i32) -> (i32, i32) {
    %c0_i32 = arith.constant 0 : i32
    return %arg1, %arg0 : i32, i32
  }
  func.func @transform_1(%arg0: i32, %arg1: i32) -> (i32, i32) {
    %c0_i32 = arith.constant 0 : i32
    return %arg1, %arg0 : i32, i32
  }
  func.func @transform_2(%arg0: i32, %arg1: i32) -> (i32, i32) {
    %c0_i32 = arith.constant 0 : i32
    %c0_i32_0 = arith.constant 0 : i32
    return %c0_i32, %arg0 : i32, i32
  }
  func.func @transform_3(%arg0: i32, %arg1: i32) -> (i32, i32) {
    %c0_i32 = arith.constant 0 : i32
    %c0_i32_0 = arith.constant 0 : i32
    return %c0_i32, %arg0 : i32, i32
  }
  func.func @transform_4(%arg0: i32, %arg1: i32) -> (i32, i32) {
    %c0_i32 = arith.constant 0 : i32
    %c0_i32_0 = arith.constant 0 : i32
    %c0_i32_1 = arith.constant 0 : i32
    return %c0_i32, %c0_i32_0 : i32, i32
  }
  func.func @transform_5(%arg0: i32, %arg1: i32) -> (i32, i32) {
    %c0_i32 = arith.constant 0 : i32
    %c0_i32_0 = arith.constant 0 : i32
    %c0_i32_1 = arith.constant 0 : i32
    return %c0_i32, %c0_i32_0 : i32, i32
  }
  func.func @transform_6(%arg0: i32, %arg1: i32) -> (i32, i32) {
    %c0_i32 = arith.constant 0 : i32
    %c0_i32_0 = arith.constant 0 : i32
    %c0_i32_1 = arith.constant 0 : i32
    return %c0_i32, %c0_i32_0 : i32, i32
  }
  func.func @transform_7(%arg0: i32, %arg1: i32) -> (i32, i32, i32) {
    %c0_i32 = arith.constant 0 : i32
    %c0_i32_0 = arith.constant 0 : i32
    return %c0_i32, %arg1, %arg0 : i32, i32, i32
  }
}

</mosaic_0001>

<llo_original>
// kernel: tpu_custom_call.1
$region0: #{tpu_custom_call.1}
  #allocation0 [shape = 'u32[]', space=smem, size = 0x4, offset = 0x4, fixed_abs, tag = 'smem constant byte address 0x4 - core index']
  #allocation1 [shape = 'u32[144,128]{1,0:T(1,128)}', space=vmem, size = 0x12000, scoped, tag = 'internal scratch']
  #allocation2 [shape = 'f32[8,8]{1,0:T(8,128)}', space=vmem, size = 0x1000, scoped, tag = 'scratch operand']
  %s0 = inlined_call_operand.vmem [shape: f32[24,8], index: 0, kind: input, shape index: {}]
  %s1 = inlined_call_operand.vmem [shape: f32[24,8], index: 1, kind: input, shape index: {}]
  %s2 = inlined_call_operand.vmem [shape: f32[16,8], index: 2, kind: input, shape index: {}]
  %s3 = inlined_call_operand.vmem [shape: f32[8,8], index: 3, kind: input, shape index: {}]
  %s4 = inlined_call_operand.vmem [shape: f32[16,8], index: 4, kind: input, shape index: {}]
  %s5 = inlined_call_operand.vmem [shape: f32[8,16], index: 5, kind: input, shape index: {}]
  %s6 = inlined_call_operand.vmem [shape: f32[8,1], index: 6, kind: input, shape index: {}]
  %s7 = inlined_call_operand.vmem [shape: f32[2,24,8], index: 7, kind: output, shape index: {}]
  %s8 = sld [smem:[#allocation0]]
  $region49: #{tpu_custom_call.1} parent=0
    _
  %s10 = ssub.s32 1, %s8
  %s11 = scalar_select 0, %s10, %s8
  // Predicated region
  $region2: #{tpu_custom_call.1} parent=0 // pred_check
    _
  $region3: #{tpu_custom_call.1} parent=0 // pred_check_branch
    %13 = sbr.rel (0) target = $region5
  $region4: #{tpu_custom_call.1} parent=0 // pred_region
    _
  $region5: #{tpu_custom_call.1} parent=0 // pred_fallthru
    _
  // Predicated region
  $region6: #{tpu_custom_call.1} parent=0 // pred_check
    _
  $region7: #{tpu_custom_call.1} parent=0 // pred_check_branch
    %15 = sbr.rel (0) target = $region9
  $region8: #{tpu_custom_call.1} parent=0 // pred_region
    _
  $region9: #{tpu_custom_call.1} parent=0 // pred_fallthru
    _
  // Predicated region
  $region10: #{tpu_custom_call.1} parent=0 // pred_check
    _
  $region11: #{tpu_custom_call.1} parent=0 // pred_check_branch
    %17 = sbr.rel (0) target = $region13
  $region12: #{tpu_custom_call.1} parent=0 // pred_region
    _
  $region13: #{tpu_custom_call.1} parent=0 // pred_fallthru
    _
  // Predicated region
  $region14: #{tpu_custom_call.1} parent=0 // pred_check
    _
  $region15: #{tpu_custom_call.1} parent=0 // pred_check_branch
    %19 = sbr.rel (0) target = $region17
  $region16: #{tpu_custom_call.1} parent=0 // pred_region
    _
  $region17: #{tpu_custom_call.1} parent=0 // pred_fallthru
    _
  // Predicated region
  $region18: #{tpu_custom_call.1} parent=0 // pred_check
    _
  $region19: #{tpu_custom_call.1} parent=0 // pred_check_branch
    %21 = sbr.rel (0) target = $region21
  $region20: #{tpu_custom_call.1} parent=0 // pred_region
    _
  $region21: #{tpu_custom_call.1} parent=0 // pred_fallthru
    _
  // Predicated region
  $region22: #{tpu_custom_call.1} parent=0 // pred_check
    _
  $region23: #{tpu_custom_call.1} parent=0 // pred_check_branch
    %23 = sbr.rel (0) target = $region25
  $region24: #{tpu_custom_call.1} parent=0 // pred_region
    _
  $region25: #{tpu_custom_call.1} parent=0 // pred_fallthru
    _
  // Predicated region
  $region26: #{tpu_custom_call.1} parent=0 // pred_check
    _
  $region27: #{tpu_custom_call.1} parent=0 // pred_check_branch
    %25 = sbr.rel (0) target = $region29
  $region28: #{tpu_custom_call.1} parent=0 // pred_region
    _
  $region29: #{tpu_custom_call.1} parent=0 // pred_fallthru
    _
  %v26 = vld [vmem:[%s2] sm:$0xff]
  %v27 = vld [vmem:[%s2 + $0x8] sm:$0xff]
  %v28 = vld [vmem:[%s4] sm:$0xff]
  %v29 = vld [vmem:[%s4 + $0x8] sm:$0xff]
  %31 = vset.pattern.permute.xlu0 0
  %32 = vperm.xlu0 %31, %v28
  %v33 = vpop.permute.xlu0 %32
  %36 = vset.pattern.permute.xlu0 0
  %37 = vperm.xlu0 %36, %v29
  %v38 = vpop.permute.xlu0 %37
  %40 = vset.pattern.permute.xlu0 1
  %41 = vperm.xlu0 %40, %v28
  %v42 = vpop.permute.xlu0 %41
  %44 = vset.pattern.permute.xlu0 1
  %45 = vperm.xlu0 %44, %v29
  %v46 = vpop.permute.xlu0 %45
  %48 = vset.pattern.permute.xlu0 2
  %49 = vperm.xlu0 %48, %v28
  %v50 = vpop.permute.xlu0 %49
  %52 = vset.pattern.permute.xlu0 2
  %53 = vperm.xlu0 %52, %v29
  %v54 = vpop.permute.xlu0 %53
  %v56 = vld [vmem:[%s5] sm:$0xff]
  %58 = vset.pattern.permute.xlu0 0
  %59 = vperm.xlu0 %58, %v56
  %v60 = vpop.permute.xlu0 %59
  %62 = vset.pattern.permute.xlu0 1
  %63 = vperm.xlu0 %62, %v56
  %v64 = vpop.permute.xlu0 %63
  %66 = vset.pattern.permute.xlu0 2
  %67 = vperm.xlu0 %66, %v56
  %v68 = vpop.permute.xlu0 %67
  %70 = vset.pattern.permute.xlu0 3
  %71 = vperm.xlu0 %70, %v56
  %v72 = vpop.permute.xlu0 %71
  %74 = vset.pattern.permute.xlu0 4
  %75 = vperm.xlu0 %74, %v56
  %v76 = vpop.permute.xlu0 %75
  %78 = vset.pattern.permute.xlu0 5
  %79 = vperm.xlu0 %78, %v56
  %v80 = vpop.permute.xlu0 %79
  %82 = vset.pattern.permute.xlu0 6
  %83 = vperm.xlu0 %82, %v56
  %v84 = vpop.permute.xlu0 %83
  %86 = vset.pattern.permute.xlu0 7
  %87 = vperm.xlu0 %86, %v56
  %v88 = vpop.permute.xlu0 %87
  %90 = vset.pattern.permute.xlu0 8
  %91 = vperm.xlu0 %90, %v56
  %v92 = vpop.permute.xlu0 %91
  %94 = vset.pattern.permute.xlu0 9
  %95 = vperm.xlu0 %94, %v56
  %v96 = vpop.permute.xlu0 %95
  %v98 = vld [vmem:[%s6] sm:$0xff]
  %100 = vset.pattern.permute.xlu0 0
  %101 = vperm.xlu0 %100, %v98
  %v102 = vpop.permute.xlu0 %101
  %p104 = scmp.eq.s32.totalorder 0, 0
  // Predicated region
  $region30: #{tpu_custom_call.1} parent=0 // pred_check
    %p105 = pneg %p104
  $region31: #{tpu_custom_call.1} parent=0 // pred_check_branch
    %107 = sbr.rel (%p105) target = $region33
  $region32: #{tpu_custom_call.1} parent=0 // pred_region
    %v108 = vld [vmem:[%s3] sm:$0xff]
    %vm109 = vcmask 64512
    %110 = vst.msk [vmem:[#allocation2] sm:$0xff] %vm109, %v108
  $region33: #{tpu_custom_call.1} parent=0 // pred_fallthru
    _
  %v111 = vld [vmem:[#allocation2] sm:$0xff]
  loop: start=0, step=1, limit=3
  $region34: #{tpu_custom_call.1} parent=0 // loop_pre_header
    _
  $region35: #{tpu_custom_call.1} parent=0 // loop_header
    %s113 = sphi 0, %s117
    %p114 = scmp.ge.s32.totalorder %s113, 3
    %v118 = vphi %v111, %v859
  $region36: #{tpu_custom_call.1} parent=0 // loop_header_branch
    %116 = sbr.rel (%p114) target = $region40
  $region37: #{tpu_custom_call.1} parent=0 // loop_body
    %s119 = smul.u32 %s113, 8
    %s120 = scalar_lea.vmem %s0, %s119
    %v121 = vld [vmem:[%s120] sm:$0xff]
    %s122 = scalar_lea.vmem %s1, %s119
    %v123 = vld [vmem:[%s122] sm:$0xff]
    %v124 = vlaneseq
    %v125 = vshrl.u32 %v124, 7
    %v126 = vsub.s32 0, %v125
    %v127 = vrot.slane %v123, %v126
    %v128 = vmul.f32 %v33, %v127
    %v129 = vmul.f32 %v38, %v127
    %v130 = vadd.f32 %v26, %v128
    %v131 = vadd.f32 %v27, %v129
    %v132 = vlaneseq
    %v133 = vshrl.u32 %v132, 7
    %v134 = vsub.s32 0, %v133
    %v135 = vrot.slane %v118, %v134
    %v136 = vmul.f32 %v42, %v135
    %v137 = vmul.f32 %v46, %v135
    %v138 = vlaneseq
    %v139 = vshrl.u32 %v138, 7
    %v140 = vsub.s32 1, %v139
    %v141 = vrot.slane %v118, %v140
    %v142 = vmul.f32 %v50, %v141
    %v143 = vmul.f32 %v54, %v141
    %v144 = vadd.f32 %v136, %v142
    %v145 = vadd.f32 %v137, %v143
    %v146 = vadd.f32 %v130, %v144
    %v147 = vadd.f32 %v131, %v145
    %v148 = vtanh.pop %v146
    %v149 = vtanh.pop %v147
    %v150 = vlaneseq
    %v151 = vshrl.u32 %v150, 7
    %v152 = vsub.s32 0, %v151
    %v153 = vrot.slane %v148, %v152
    %v154 = vmul.f32 %v60, %v153
    %v155 = vlaneseq
    %v156 = vshrl.u32 %v155, 7
    %v157 = vsub.s32 1, %v156
    %v158 = vrot.slane %v148, %v157
    %v159 = vmul.f32 %v64, %v158
    %v160 = vlaneseq
    %v161 = vshrl.u32 %v160, 7
    %v162 = vsub.s32 2, %v161
    %v163 = vrot.slane %v148, %v162
    %v164 = vmul.f32 %v68, %v163
    %v165 = vlaneseq
    %v166 = vshrl.u32 %v165, 7
    %v167 = vsub.s32 3, %v166
    %v168 = vrot.slane %v148, %v167
    %v169 = vmul.f32 %v72, %v168
    %v170 = vlaneseq
    %v171 = vshrl.u32 %v170, 7
    %v172 = vsub.s32 4, %v171
    %v173 = vrot.slane %v148, %v172
    %v174 = vmul.f32 %v76, %v173
    %v175 = vlaneseq
    %v176 = vshrl.u32 %v175, 7
    %v177 = vsub.s32 5, %v176
    %v178 = vrot.slane %v148, %v177
    %v179 = vmul.f32 %v80, %v178
    %v180 = vlaneseq
    %v181 = vshrl.u32 %v180, 7
    %v182 = vsub.s32 6, %v181
    %v183 = vrot.slane %v148, %v182
    %v184 = vmul.f32 %v84, %v183
    %v185 = vlaneseq
    %v186 = vshrl.u32 %v185, 7
    %v187 = vsub.s32 7, %v186
    %v188 = vrot.slane %v148, %v187
    %v189 = vmul.f32 %v88, %v188
    %v190 = vlaneseq
    %v191 = vshrl.u32 %v190, 7
    %v192 = vsub.s32 0, %v191
    %v193 = vrot.slane %v149, %v192
    %v194 = vmul.f32 %v92, %v193
    %v195 = vlaneseq
    %v196 = vshrl.u32 %v195, 7
    %v197 = vsub.s32 1, %v196
    %v198 = vrot.slane %v149, %v197
    %v199 = vmul.f32 %v96, %v198
    %v200 = vadd.f32 %v154, %v159
    %v201 = vadd.f32 %v164, %v169
    %v202 = vadd.f32 %v174, %v179
    %v203 = vadd.f32 %v184, %v189
    %v204 = vadd.f32 %v194, %v199
    %v205 = vadd.f32 %v200, %v201
    %v206 = vadd.f32 %v202, %v203
    %v207 = vadd.f32 %v204, %v102
    %v208 = vadd.f32 %v205, %v206
    %v209 = vadd.f32 %v208, %v207
    %v210 = vlaneseq
    %v211 = vshrl.u32 %v210, 7
    %v212 = vsub.s32 0, %v211
    %v213 = vrot.slane %v121, %v212
    %v214 = vmul.f32 %v213, %v209
    %v215 = vadd.f32 %v118, %v214
    %v216 = vlaneseq
    %v217 = vshrl.u32 %v216, 7
    %v218 = vsub.s32 1, %v217
    %v219 = vrot.slane %v123, %v218
    %v220 = vmul.f32 %v33, %v219
    %v221 = vmul.f32 %v38, %v219
    %v222 = vadd.f32 %v26, %v220
    %v223 = vadd.f32 %v27, %v221
    %v224 = vlaneseq
    %v225 = vshrl.u32 %v224, 7
    %v226 = vsub.s32 0, %v225
    %v227 = vrot.slane %v215, %v226
    %v228 = vmul.f32 %v42, %v227
    %v229 = vmul.f32 %v46, %v227
    %v230 = vlaneseq
    %v231 = vshrl.u32 %v230, 7
    %v232 = vsub.s32 1, %v231
    %v233 = vrot.slane %v215, %v232
    %v234 = vmul.f32 %v50, %v233
    %v235 = vmul.f32 %v54, %v233
    %v236 = vadd.f32 %v228, %v234
    %v237 = vadd.f32 %v229, %v235
    %v238 = vadd.f32 %v222, %v236
    %v239 = vadd.f32 %v223, %v237
    %v240 = vtanh.pop %v238
    %v241 = vtanh.pop %v239
    %v242 = vlaneseq
    %v243 = vshrl.u32 %v242, 7
    %v244 = vsub.s32 0, %v243
    %v245 = vrot.slane %v240, %v244
    %v246 = vmul.f32 %v60, %v245
    %v247 = vlaneseq
    %v248 = vshrl.u32 %v247, 7
    %v249 = vsub.s32 1, %v248
    %v250 = vrot.slane %v240, %v249
    %v251 = vmul.f32 %v64, %v250
    %v252 = vlaneseq
    %v253 = vshrl.u32 %v252, 7
    %v254 = vsub.s32 2, %v253
    %v255 = vrot.slane %v240, %v254
    %v256 = vmul.f32 %v68, %v255
    %v257 = vlaneseq
    %v258 = vshrl.u32 %v257, 7
    %v259 = vsub.s32 3, %v258
    %v260 = vrot.slane %v240, %v259
    %v261 = vmul.f32 %v72, %v260
    %v262 = vlaneseq
    %v263 = vshrl.u32 %v262, 7
    %v264 = vsub.s32 4, %v263
    %v265 = vrot.slane %v240, %v264
    %v266 = vmul.f32 %v76, %v265
    %v267 = vlaneseq
    %v268 = vshrl.u32 %v267, 7
    %v269 = vsub.s32 5, %v268
    %v270 = vrot.slane %v240, %v269
    %v271 = vmul.f32 %v80, %v270
    %v272 = vlaneseq
    %v273 = vshrl.u32 %v272, 7
    %v274 = vsub.s32 6, %v273
    %v275 = vrot.slane %v240, %v274
    %v276 = vmul.f32 %v84, %v275
    %v277 = vlaneseq
    %v278 = vshrl.u32 %v277, 7
    %v279 = vsub.s32 7, %v278
    %v280 = vrot.slane %v240, %v279
    %v281 = vmul.f32 %v88, %v280
    %v282 = vlaneseq
    %v283 = vshrl.u32 %v282, 7
    %v284 = vsub.s32 0, %v283
    %v285 = vrot.slane %v241, %v284
    %v286 = vmul.f32 %v92, %v285
    %v287 = vlaneseq
    %v288 = vshrl.u32 %v287, 7
    %v289 = vsub.s32 1, %v288
    %v290 = vrot.slane %v241, %v289
    %v291 = vmul.f32 %v96, %v290
    %v292 = vadd.f32 %v246, %v251
    %v293 = vadd.f32 %v256, %v261
    %v294 = vadd.f32 %v266, %v271
    %v295 = vadd.f32 %v276, %v281
    %v296 = vadd.f32 %v286, %v291
    %v297 = vadd.f32 %v292, %v293
    %v298 = vadd.f32 %v294, %v295
    %v299 = vadd.f32 %v296, %v102
    %v300 = vadd.f32 %v297, %v298
    %v301 = vadd.f32 %v300, %v299
    %v302 = vlaneseq
    %v303 = vshrl.u32 %v302, 7
    %v304 = vsub.s32 1, %v303
    %v305 = vrot.slane %v121, %v304
    %v306 = vmul.f32 %v305, %v301
    %v307 = vadd.f32 %v215, %v306
    %v308 = vlaneseq
    %v309 = vshrl.u32 %v308, 7
    %v310 = vsub.s32 2, %v309
    %v311 = vrot.slane %v123, %v310
    %v312 = vmul.f32 %v33, %v311
    %v313 = vmul.f32 %v38, %v311
    %v314 = vadd.f32 %v26, %v312
    %v315 = vadd.f32 %v27, %v313
    %v316 = vlaneseq
    %v317 = vshrl.u32 %v316, 7
    %v318 = vsub.s32 0, %v317
    %v319 = vrot.slane %v307, %v318
    %v320 = vmul.f32 %v42, %v319
    %v321 = vmul.f32 %v46, %v319
    %v322 = vlaneseq
    %v323 = vshrl.u32 %v322, 7
    %v324 = vsub.s32 1, %v323
    %v325 = vrot.slane %v307, %v324
    %v326 = vmul.f32 %v50, %v325
    %v327 = vmul.f32 %v54, %v325
    %v328 = vadd.f32 %v320, %v326
    %v329 = vadd.f32 %v321, %v327
    %v330 = vadd.f32 %v314, %v328
    %v331 = vadd.f32 %v315, %v329
    %v332 = vtanh.pop %v330
    %v333 = vtanh.pop %v331
    %v334 = vlaneseq
    %v335 = vshrl.u32 %v334, 7
    %v336 = vsub.s32 0, %v335
    %v337 = vrot.slane %v332, %v336
    %v338 = vmul.f32 %v60, %v337
    %v339 = vlaneseq
    %v340 = vshrl.u32 %v339, 7
    %v341 = vsub.s32 1, %v340
    %v342 = vrot.slane %v332, %v341
    %v343 = vmul.f32 %v64, %v342
    %v344 = vlaneseq
    %v345 = vshrl.u32 %v344, 7
    %v346 = vsub.s32 2, %v345
    %v347 = vrot.slane %v332, %v346
    %v348 = vmul.f32 %v68, %v347
    %v349 = vlaneseq
    %v350 = vshrl.u32 %v349, 7
    %v351 = vsub.s32 3, %v350
    %v352 = vrot.slane %v332, %v351
    %v353 = vmul.f32 %v72, %v352
    %v354 = vlaneseq
    %v355 = vshrl.u32 %v354, 7
    %v356 = vsub.s32 4, %v355
    %v357 = vrot.slane %v332, %v356
    %v358 = vmul.f32 %v76, %v357
    %v359 = vlaneseq
    %v360 = vshrl.u32 %v359, 7
    %v361 = vsub.s32 5, %v360
    %v362 = vrot.slane %v332, %v361
    %v363 = vmul.f32 %v80, %v362
    %v364 = vlaneseq
    %v365 = vshrl.u32 %v364, 7
    %v366 = vsub.s32 6, %v365
    %v367 = vrot.slane %v332, %v366
    %v368 = vmul.f32 %v84, %v367
    %v369 = vlaneseq
    %v370 = vshrl.u32 %v369, 7
    %v371 = vsub.s32 7, %v370
    %v372 = vrot.slane %v332, %v371
    %v373 = vmul.f32 %v88, %v372
    %v374 = vlaneseq
    %v375 = vshrl.u32 %v374, 7
    %v376 = vsub.s32 0, %v375
    %v377 = vrot.slane %v333, %v376
    %v378 = vmul.f32 %v92, %v377
    %v379 = vlaneseq
    %v380 = vshrl.u32 %v379, 7
    %v381 = vsub.s32 1, %v380
    %v382 = vrot.slane %v333, %v381
    %v383 = vmul.f32 %v96, %v382
    %v384 = vadd.f32 %v338, %v343
    %v385 = vadd.f32 %v348, %v353
    %v386 = vadd.f32 %v358, %v363
    %v387 = vadd.f32 %v368, %v373
    %v388 = vadd.f32 %v378, %v383
    %v389 = vadd.f32 %v384, %v385
    %v390 = vadd.f32 %v386, %v387
    %v391 = vadd.f32 %v388, %v102
    %v392 = vadd.f32 %v389, %v390
    %v393 = vadd.f32 %v392, %v391
    %v394 = vlaneseq
    %v395 = vshrl.u32 %v394, 7
    %v396 = vsub.s32 2, %v395
    %v397 = vrot.slane %v121, %v396
    %v398 = vmul.f32 %v397, %v393
    %v399 = vadd.f32 %v307, %v398
    %v400 = vlaneseq
    %v401 = vshrl.u32 %v400, 7
    %v402 = vsub.s32 3, %v401
    %v403 = vrot.slane %v123, %v402
    %v404 = vmul.f32 %v33, %v403
    %v405 = vmul.f32 %v38, %v403
    %v406 = vadd.f32 %v26, %v404
    %v407 = vadd.f32 %v27, %v405
    %v408 = vlaneseq
    %v409 = vshrl.u32 %v408, 7
    %v410 = vsub.s32 0, %v409
    %v411 = vrot.slane %v399, %v410
    %v412 = vmul.f32 %v42, %v411
    %v413 = vmul.f32 %v46, %v411
    %v414 = vlaneseq
    %v415 = vshrl.u32 %v414, 7
    %v416 = vsub.s32 1, %v415
    %v417 = vrot.slane %v399, %v416
    %v418 = vmul.f32 %v50, %v417
    %v419 = vmul.f32 %v54, %v417
    %v420 = vadd.f32 %v412, %v418
    %v421 = vadd.f32 %v413, %v419
    %v422 = vadd.f32 %v406, %v420
    %v423 = vadd.f32 %v407, %v421
    %v424 = vtanh.pop %v422
    %v425 = vtanh.pop %v423
    %v426 = vlaneseq
    %v427 = vshrl.u32 %v426, 7
    %v428 = vsub.s32 0, %v427
    %v429 = vrot.slane %v424, %v428
    %v430 = vmul.f32 %v60, %v429
    %v431 = vlaneseq
    %v432 = vshrl.u32 %v431, 7
    %v433 = vsub.s32 1, %v432
    %v434 = vrot.slane %v424, %v433
    %v435 = vmul.f32 %v64, %v434
    %v436 = vlaneseq
    %v437 = vshrl.u32 %v436, 7
    %v438 = vsub.s32 2, %v437
    %v439 = vrot.slane %v424, %v438
    %v440 = vmul.f32 %v68, %v439
    %v441 = vlaneseq
    %v442 = vshrl.u32 %v441, 7
    %v443 = vsub.s32 3, %v442
    %v444 = vrot.slane %v424, %v443
    %v445 = vmul.f32 %v72, %v444
    %v446 = vlaneseq
    %v447 = vshrl.u32 %v446, 7
    %v448 = vsub.s32 4, %v447
    %v449 = vrot.slane %v424, %v448
    %v450 = vmul.f32 %v76, %v449
    %v451 = vlaneseq
    %v452 = vshrl.u32 %v451, 7
    %v453 = vsub.s32 5, %v452
    %v454 = vrot.slane %v424, %v453
    %v455 = vmul.f32 %v80, %v454
    %v456 = vlaneseq
    %v457 = vshrl.u32 %v456, 7
    %v458 = vsub.s32 6, %v457
    %v459 = vrot.slane %v424, %v458
    %v460 = vmul.f32 %v84, %v459
    %v461 = vlaneseq
    %v462 = vshrl.u32 %v461, 7
    %v463 = vsub.s32 7, %v462
    %v464 = vrot.slane %v424, %v463
    %v465 = vmul.f32 %v88, %v464
    %v466 = vlaneseq
    %v467 = vshrl.u32 %v466, 7
    %v468 = vsub.s32 0, %v467
    %v469 = vrot.slane %v425, %v468
    %v470 = vmul.f32 %v92, %v469
    %v471 = vlaneseq
    %v472 = vshrl.u32 %v471, 7
    %v473 = vsub.s32 1, %v472
    %v474 = vrot.slane %v425, %v473
    %v475 = vmul.f32 %v96, %v474
    %v476 = vadd.f32 %v430, %v435
    %v477 = vadd.f32 %v440, %v445
    %v478 = vadd.f32 %v450, %v455
    %v479 = vadd.f32 %v460, %v465
    %v480 = vadd.f32 %v470, %v475
    %v481 = vadd.f32 %v476, %v477
    %v482 = vadd.f32 %v478, %v479
    %v483 = vadd.f32 %v480, %v102
    %v484 = vadd.f32 %v481, %v482
    %v485 = vadd.f32 %v484, %v483
    %v486 = vlaneseq
    %v487 = vshrl.u32 %v486, 7
    %v488 = vsub.s32 3, %v487
    %v489 = vrot.slane %v121, %v488
    %v490 = vmul.f32 %v489, %v485
    %v491 = vadd.f32 %v399, %v490
    %v492 = vlaneseq
    %v493 = vshrl.u32 %v492, 7
    %v494 = vsub.s32 4, %v493
    %v495 = vrot.slane %v123, %v494
    %v496 = vmul.f32 %v33, %v495
    %v497 = vmul.f32 %v38, %v495
    %v498 = vadd.f32 %v26, %v496
    %v499 = vadd.f32 %v27, %v497
    %v500 = vlaneseq
    %v501 = vshrl.u32 %v500, 7
    %v502 = vsub.s32 0, %v501
    %v503 = vrot.slane %v491, %v502
    %v504 = vmul.f32 %v42, %v503
    %v505 = vmul.f32 %v46, %v503
    %v506 = vlaneseq
    %v507 = vshrl.u32 %v506, 7
    %v508 = vsub.s32 1, %v507
    %v509 = vrot.slane %v491, %v508
    %v510 = vmul.f32 %v50, %v509
    %v511 = vmul.f32 %v54, %v509
    %v512 = vadd.f32 %v504, %v510
    %v513 = vadd.f32 %v505, %v511
    %v514 = vadd.f32 %v498, %v512
    %v515 = vadd.f32 %v499, %v513
    %v516 = vtanh.pop %v514
    %v517 = vtanh.pop %v515
    %v518 = vlaneseq
    %v519 = vshrl.u32 %v518, 7
    %v520 = vsub.s32 0, %v519
    %v521 = vrot.slane %v516, %v520
    %v522 = vmul.f32 %v60, %v521
    %v523 = vlaneseq
    %v524 = vshrl.u32 %v523, 7
    %v525 = vsub.s32 1, %v524
    %v526 = vrot.slane %v516, %v525
    %v527 = vmul.f32 %v64, %v526
    %v528 = vlaneseq
    %v529 = vshrl.u32 %v528, 7
    %v530 = vsub.s32 2, %v529
    %v531 = vrot.slane %v516, %v530
    %v532 = vmul.f32 %v68, %v531
    %v533 = vlaneseq
    %v534 = vshrl.u32 %v533, 7
    %v535 = vsub.s32 3, %v534
    %v536 = vrot.slane %v516, %v535
    %v537 = vmul.f32 %v72, %v536
    %v538 = vlaneseq
    %v539 = vshrl.u32 %v538, 7
    %v540 = vsub.s32 4, %v539
    %v541 = vrot.slane %v516, %v540
    %v542 = vmul.f32 %v76, %v541
    %v543 = vlaneseq
    %v544 = vshrl.u32 %v543, 7
    %v545 = vsub.s32 5, %v544
    %v546 = vrot.slane %v516, %v545
    %v547 = vmul.f32 %v80, %v546
    %v548 = vlaneseq
    %v549 = vshrl.u32 %v548, 7
    %v550 = vsub.s32 6, %v549
    %v551 = vrot.slane %v516, %v550
    %v552 = vmul.f32 %v84, %v551
    %v553 = vlaneseq
    %v554 = vshrl.u32 %v553, 7
    %v555 = vsub.s32 7, %v554
    %v556 = vrot.slane %v516, %v555
    %v557 = vmul.f32 %v88, %v556
    %v558 = vlaneseq
    %v559 = vshrl.u32 %v558, 7
    %v560 = vsub.s32 0, %v559
    %v561 = vrot.slane %v517, %v560
    %v562 = vmul.f32 %v92, %v561
    %v563 = vlaneseq
    %v564 = vshrl.u32 %v563, 7
    %v565 = vsub.s32 1, %v564
    %v566 = vrot.slane %v517, %v565
    %v567 = vmul.f32 %v96, %v566
    %v568 = vadd.f32 %v522, %v527
    %v569 = vadd.f32 %v532, %v537
    %v570 = vadd.f32 %v542, %v547
    %v571 = vadd.f32 %v552, %v557
    %v572 = vadd.f32 %v562, %v567
    %v573 = vadd.f32 %v568, %v569
    %v574 = vadd.f32 %v570, %v571
    %v575 = vadd.f32 %v572, %v102
    %v576 = vadd.f32 %v573, %v574
    %v577 = vadd.f32 %v576, %v575
    %v578 = vlaneseq
    %v579 = vshrl.u32 %v578, 7
    %v580 = vsub.s32 4, %v579
    %v581 = vrot.slane %v121, %v580
    %v582 = vmul.f32 %v581, %v577
    %v583 = vadd.f32 %v491, %v582
    %v584 = vlaneseq
    %v585 = vshrl.u32 %v584, 7
    %v586 = vsub.s32 5, %v585
    %v587 = vrot.slane %v123, %v586
    %v588 = vmul.f32 %v33, %v587
    %v589 = vmul.f32 %v38, %v587
    %v590 = vadd.f32 %v26, %v588
    %v591 = vadd.f32 %v27, %v589
    %v592 = vlaneseq
    %v593 = vshrl.u32 %v592, 7
    %v594 = vsub.s32 0, %v593
    %v595 = vrot.slane %v583, %v594
    %v596 = vmul.f32 %v42, %v595
    %v597 = vmul.f32 %v46, %v595
    %v598 = vlaneseq
    %v599 = vshrl.u32 %v598, 7
    %v600 = vsub.s32 1, %v599
    %v601 = vrot.slane %v583, %v600
    %v602 = vmul.f32 %v50, %v601
    %v603 = vmul.f32 %v54, %v601
    %v604 = vadd.f32 %v596, %v602
    %v605 = vadd.f32 %v597, %v603
    %v606 = vadd.f32 %v590, %v604
    %v607 = vadd.f32 %v591, %v605
    %v608 = vtanh.pop %v606
    %v609 = vtanh.pop %v607
    %v610 = vlaneseq
    %v611 = vshrl.u32 %v610, 7
    %v612 = vsub.s32 0, %v611
    %v613 = vrot.slane %v608, %v612
    %v614 = vmul.f32 %v60, %v613
    %v615 = vlaneseq
    %v616 = vshrl.u32 %v615, 7
    %v617 = vsub.s32 1, %v616
    %v618 = vrot.slane %v608, %v617
    %v619 = vmul.f32 %v64, %v618
    %v620 = vlaneseq
    %v621 = vshrl.u32 %v620, 7
    %v622 = vsub.s32 2, %v621
    %v623 = vrot.slane %v608, %v622
    %v624 = vmul.f32 %v68, %v623
    %v625 = vlaneseq
    %v626 = vshrl.u32 %v625, 7
    %v627 = vsub.s32 3, %v626
    %v628 = vrot.slane %v608, %v627
    %v629 = vmul.f32 %v72, %v628
    %v630 = vlaneseq
    %v631 = vshrl.u32 %v630, 7
    %v632 = vsub.s32 4, %v631
    %v633 = vrot.slane %v608, %v632
    %v634 = vmul.f32 %v76, %v633
    %v635 = vlaneseq
    %v636 = vshrl.u32 %v635, 7
    %v637 = vsub.s32 5, %v636
    %v638 = vrot.slane %v608, %v637
    %v639 = vmul.f32 %v80, %v638
    %v640 = vlaneseq
    %v641 = vshrl.u32 %v640, 7
    %v642 = vsub.s32 6, %v641
    %v643 = vrot.slane %v608, %v642
    %v644 = vmul.f32 %v84, %v643
    %v645 = vlaneseq
    %v646 = vshrl.u32 %v645, 7
    %v647 = vsub.s32 7, %v646
    %v648 = vrot.slane %v608, %v647
    %v649 = vmul.f32 %v88, %v648
    %v650 = vlaneseq
    %v651 = vshrl.u32 %v650, 7
    %v652 = vsub.s32 0, %v651
    %v653 = vrot.slane %v609, %v652
    %v654 = vmul.f32 %v92, %v653
    %v655 = vlaneseq
    %v656 = vshrl.u32 %v655, 7
    %v657 = vsub.s32 1, %v656
    %v658 = vrot.slane %v609, %v657
    %v659 = vmul.f32 %v96, %v658
    %v660 = vadd.f32 %v614, %v619
    %v661 = vadd.f32 %v624, %v629
    %v662 = vadd.f32 %v634, %v639
    %v663 = vadd.f32 %v644, %v649
    %v664 = vadd.f32 %v654, %v659
    %v665 = vadd.f32 %v660, %v661
    %v666 = vadd.f32 %v662, %v663
    %v667 = vadd.f32 %v664, %v102
    %v668 = vadd.f32 %v665, %v666
    %v669 = vadd.f32 %v668, %v667
    %v670 = vlaneseq
    %v671 = vshrl.u32 %v670, 7
    %v672 = vsub.s32 5, %v671
    %v673 = vrot.slane %v121, %v672
    %v674 = vmul.f32 %v673, %v669
    %v675 = vadd.f32 %v583, %v674
    %v676 = vlaneseq
    %v677 = vshrl.u32 %v676, 7
    %v678 = vsub.s32 6, %v677
    %v679 = vrot.slane %v123, %v678
    %v680 = vmul.f32 %v33, %v679
    %v681 = vmul.f32 %v38, %v679
    %v682 = vadd.f32 %v26, %v680
    %v683 = vadd.f32 %v27, %v681
    %v684 = vlaneseq
    %v685 = vshrl.u32 %v684, 7
    %v686 = vsub.s32 0, %v685
    %v687 = vrot.slane %v675, %v686
    %v688 = vmul.f32 %v42, %v687
    %v689 = vmul.f32 %v46, %v687
    %v690 = vlaneseq
    %v691 = vshrl.u32 %v690, 7
    %v692 = vsub.s32 1, %v691
    %v693 = vrot.slane %v675, %v692
    %v694 = vmul.f32 %v50, %v693
    %v695 = vmul.f32 %v54, %v693
    %v696 = vadd.f32 %v688, %v694
    %v697 = vadd.f32 %v689, %v695
    %v698 = vadd.f32 %v682, %v696
    %v699 = vadd.f32 %v683, %v697
    %v700 = vtanh.pop %v698
    %v701 = vtanh.pop %v699
    %v702 = vlaneseq
    %v703 = vshrl.u32 %v702, 7
    %v704 = vsub.s32 0, %v703
    %v705 = vrot.slane %v700, %v704
    %v706 = vmul.f32 %v60, %v705
    %v707 = vlaneseq
    %v708 = vshrl.u32 %v707, 7
    %v709 = vsub.s32 1, %v708
    %v710 = vrot.slane %v700, %v709
    %v711 = vmul.f32 %v64, %v710
    %v712 = vlaneseq
    %v713 = vshrl.u32 %v712, 7
    %v714 = vsub.s32 2, %v713
    %v715 = vrot.slane %v700, %v714
    %v716 = vmul.f32 %v68, %v715
    %v717 = vlaneseq
    %v718 = vshrl.u32 %v717, 7
    %v719 = vsub.s32 3, %v718
    %v720 = vrot.slane %v700, %v719
    %v721 = vmul.f32 %v72, %v720
    %v722 = vlaneseq
    %v723 = vshrl.u32 %v722, 7
    %v724 = vsub.s32 4, %v723
    %v725 = vrot.slane %v700, %v724
    %v726 = vmul.f32 %v76, %v725
    %v727 = vlaneseq
    %v728 = vshrl.u32 %v727, 7
    %v729 = vsub.s32 5, %v728
    %v730 = vrot.slane %v700, %v729
    %v731 = vmul.f32 %v80, %v730
    %v732 = vlaneseq
    %v733 = vshrl.u32 %v732, 7
    %v734 = vsub.s32 6, %v733
    %v735 = vrot.slane %v700, %v734
    %v736 = vmul.f32 %v84, %v735
    %v737 = vlaneseq
    %v738 = vshrl.u32 %v737, 7
    %v739 = vsub.s32 7, %v738
    %v740 = vrot.slane %v700, %v739
    %v741 = vmul.f32 %v88, %v740
    %v742 = vlaneseq
    %v743 = vshrl.u32 %v742, 7
    %v744 = vsub.s32 0, %v743
    %v745 = vrot.slane %v701, %v744
    %v746 = vmul.f32 %v92, %v745
    %v747 = vlaneseq
    %v748 = vshrl.u32 %v747, 7
    %v749 = vsub.s32 1, %v748
    %v750 = vrot.slane %v701, %v749
    %v751 = vmul.f32 %v96, %v750
    %v752 = vadd.f32 %v706, %v711
    %v753 = vadd.f32 %v716, %v721
    %v754 = vadd.f32 %v726, %v731
    %v755 = vadd.f32 %v736, %v741
    %v756 = vadd.f32 %v746, %v751
    %v757 = vadd.f32 %v752, %v753
    %v758 = vadd.f32 %v754, %v755
    %v759 = vadd.f32 %v756, %v102
    %v760 = vadd.f32 %v757, %v758
    %v761 = vadd.f32 %v760, %v759
    %v762 = vlaneseq
    %v763 = vshrl.u32 %v762, 7
    %v764 = vsub.s32 6, %v763
    %v765 = vrot.slane %v121, %v764
    %v766 = vmul.f32 %v765, %v761
    %v767 = vadd.f32 %v675, %v766
    %v768 = vlaneseq
    %v769 = vshrl.u32 %v768, 7
    %v770 = vsub.s32 7, %v769
    %v771 = vrot.slane %v123, %v770
    %v772 = vmul.f32 %v33, %v771
    %v773 = vmul.f32 %v38, %v771
    %v774 = vadd.f32 %v26, %v772
    %v775 = vadd.f32 %v27, %v773
    %v776 = vlaneseq
    %v777 = vshrl.u32 %v776, 7
    %v778 = vsub.s32 0, %v777
    %v779 = vrot.slane %v767, %v778
    %v780 = vmul.f32 %v42, %v779
    %v781 = vmul.f32 %v46, %v779
    %v782 = vlaneseq
    %v783 = vshrl.u32 %v782, 7
    %v784 = vsub.s32 1, %v783
    %v785 = vrot.slane %v767, %v784
    %v786 = vmul.f32 %v50, %v785
    %v787 = vmul.f32 %v54, %v785
    %v788 = vadd.f32 %v780, %v786
    %v789 = vadd.f32 %v781, %v787
    %v790 = vadd.f32 %v774, %v788
    %v791 = vadd.f32 %v775, %v789
    %v792 = vtanh.pop %v790
    %v793 = vtanh.pop %v791
    %v794 = vlaneseq
    %v795 = vshrl.u32 %v794, 7
    %v796 = vsub.s32 0, %v795
    %v797 = vrot.slane %v792, %v796
    %v798 = vmul.f32 %v60, %v797
    %v799 = vlaneseq
    %v800 = vshrl.u32 %v799, 7
    %v801 = vsub.s32 1, %v800
    %v802 = vrot.slane %v792, %v801
    %v803 = vmul.f32 %v64, %v802
    %v804 = vlaneseq
    %v805 = vshrl.u32 %v804, 7
    %v806 = vsub.s32 2, %v805
    %v807 = vrot.slane %v792, %v806
    %v808 = vmul.f32 %v68, %v807
    %v809 = vlaneseq
    %v810 = vshrl.u32 %v809, 7
    %v811 = vsub.s32 3, %v810
    %v812 = vrot.slane %v792, %v811
    %v813 = vmul.f32 %v72, %v812
    %v814 = vlaneseq
    %v815 = vshrl.u32 %v814, 7
    %v816 = vsub.s32 4, %v815
    %v817 = vrot.slane %v792, %v816
    %v818 = vmul.f32 %v76, %v817
    %v819 = vlaneseq
    %v820 = vshrl.u32 %v819, 7
    %v821 = vsub.s32 5, %v820
    %v822 = vrot.slane %v792, %v821
    %v823 = vmul.f32 %v80, %v822
    %v824 = vlaneseq
    %v825 = vshrl.u32 %v824, 7
    %v826 = vsub.s32 6, %v825
    %v827 = vrot.slane %v792, %v826
    %v828 = vmul.f32 %v84, %v827
    %v829 = vlaneseq
    %v830 = vshrl.u32 %v829, 7
    %v831 = vsub.s32 7, %v830
    %v832 = vrot.slane %v792, %v831
    %v833 = vmul.f32 %v88, %v832
    %v834 = vlaneseq
    %v835 = vshrl.u32 %v834, 7
    %v836 = vsub.s32 0, %v835
    %v837 = vrot.slane %v793, %v836
    %v838 = vmul.f32 %v92, %v837
    %v839 = vlaneseq
    %v840 = vshrl.u32 %v839, 7
    %v841 = vsub.s32 1, %v840
    %v842 = vrot.slane %v793, %v841
    %v843 = vmul.f32 %v96, %v842
    %v844 = vadd.f32 %v798, %v803
    %v845 = vadd.f32 %v808, %v813
    %v846 = vadd.f32 %v818, %v823
    %v847 = vadd.f32 %v828, %v833
    %v848 = vadd.f32 %v838, %v843
    %v849 = vadd.f32 %v844, %v845
    %v850 = vadd.f32 %v846, %v847
    %v851 = vadd.f32 %v848, %v102
    %v852 = vadd.f32 %v849, %v850
    %v853 = vadd.f32 %v852, %v851
    %v854 = vlaneseq
    %v855 = vshrl.u32 %v854, 7
    %v856 = vsub.s32 7, %v855
    %v857 = vrot.slane %v121, %v856
    %v858 = vmul.f32 %v857, %v853
    %v859 = vadd.f32 %v767, %v858
    %v861 = vrot.slane %v307, 7
    %v864 = vrot.slane %v399, 6
    %v867 = vrot.slane %v491, 5
    %v870 = vrot.slane %v583, 4
    %v873 = vrot.slane %v675, 3
    %v876 = vrot.slane %v767, 2
    %v879 = vrot.slane %v859, 1
    %vm881 = vcmask 1040384
    %v882 = vsel %vm881, %v215, %v861
    %vm883 = vcmask 1041408
    %v884 = vsel %vm883, %v882, %v864
    %vm885 = vcmask 1042432
    %v886 = vsel %vm885, %v884, %v867
    %vm887 = vcmask 1043456
    %v888 = vsel %vm887, %v886, %v870
    %vm889 = vcmask 1044480
    %v890 = vsel %vm889, %v888, %v873
    %vm891 = vcmask 1045504
    %v892 = vsel %vm891, %v890, %v876
    %vm893 = vcmask 1046528
    %v894 = vsel %vm893, %v892, %v879
    %s895 = scalar_lea.vmem %s7, %s119
    %vm896 = vcmask 64512
    %897 = vst.msk [vmem:[%s895] sm:$0xff] %vm896, %v894
    %v899 = vrot.slane %v215, 1
    %v901 = vrot.slane %v399, 7
    %v903 = vrot.slane %v491, 6
    %v905 = vrot.slane %v583, 5
    %v907 = vrot.slane %v675, 4
    %v909 = vrot.slane %v767, 3
    %v911 = vrot.slane %v859, 2
    %v913 = vsel %vm881, %v899, %v307
    %v914 = vsel %vm883, %v913, %v901
    %v915 = vsel %vm885, %v914, %v903
    %v916 = vsel %vm887, %v915, %v905
    %v917 = vsel %vm889, %v916, %v907
    %v918 = vsel %vm891, %v917, %v909
    %v919 = vsel %vm893, %v918, %v911
    %s920 = sadd.s32 %s119, 24
    %s921 = scalar_lea.vmem %s7, %s920
    %922 = vst.msk [vmem:[%s921] sm:$0xff] %vm896, %v919
  $region38: #{tpu_custom_call.1} parent=0 // loop_footer
    %s117 = sadd.s32 1, %s113
  $region39: #{tpu_custom_call.1} parent=0 // loop_footer_branch
    %112 = sbr.rel target = $region35
  $region40: #{tpu_custom_call.1} parent=0 // loop_exit
    _
  %vm923 = vcmask 64512
  %924 = vst.msk [vmem:[#allocation2] sm:$0xff] %vm923, %v118
  // Predicated region
  $region41: #{tpu_custom_call.1} parent=0 // pred_check
    _
  $region42: #{tpu_custom_call.1} parent=0 // pred_check_branch
    %926 = sbr.rel (0) target = $region44
  $region43: #{tpu_custom_call.1} parent=0 // pred_region
    _
  $region44: #{tpu_custom_call.1} parent=0 // pred_fallthru
    _
  // Predicated region
  $region45: #{tpu_custom_call.1} parent=0 // pred_check
    _
  $region46: #{tpu_custom_call.1} parent=0 // pred_check_branch
    %928 = sbr.rel (0) target = $region48
  $region47: #{tpu_custom_call.1} parent=0 // pred_region
    _
  $region48: #{tpu_custom_call.1} parent=0 // pred_fallthru
    _

</llo_original>
